<compile_context>
chip_gen: v6e
topology: v6e:2x2x1
jax: 0.10.0
libtpu: 0.0.40
codegen_flags: <defaults>
</compile_context>

<pallas_src>
import functools
import math

import jax
import jax.numpy as jnp
from jax.experimental import pallas as pl
from jax.experimental.pallas import tpu as pltpu


def _conv2d_kernel(x_ref, w_ref, b_ref, o_ref, col_ref, *,
                   TOH, OW, C, KH, KW, sh, sw, dh, dw, M):
    # x_ref  : (1, C, Hp, Wp)   zero-padded NCHW image (resident per batch)
    # w_ref  : (OC, KK)         im2col weight matrix, row order (kh, kw, c)
    # b_ref  : (OC, 1)          bias column (f32)
    # o_ref  : (1, OC, M)       channel-major output tile, spatial on lanes
    # col_ref: (KK, M)          transposed im2col slab (VMEM scratch)
    t = pl.program_id(1)
    oh0 = t * TOH                      # first output row of this tile

    # Build the transposed im2col slab:
    #   col[(kh*KW + kw)*C + c, r*OW + q] = x_p[c, (oh0+r)*sh + kh*dh, q*sw + kw*dw]
    for kh in range(KH):               # static, unrolled (KH*KW small)
        for kw in range(KW):
            h0 = oh0 * sh + kh * dh    # dynamic (depends on tile index)
            w0 = kw * dw               # static
            h_idx = pl.ds(h0, TOH, stride=sh) if sh > 1 else pl.ds(h0, TOH)
            w_idx = pl.ds(w0, OW, stride=sw) if sw > 1 else pl.ds(w0, OW)
            patch = x_ref[0, :, h_idx, w_idx]              # (C, TOH, OW)
            c0 = (kh * KW + kw) * C
            col_ref[c0:c0 + C, :] = patch.reshape(C, M)    # full-lane store

    # One MXU matmul: (OC, KK) @ (KK, M) -> (OC, M); bias added in f32.
    acc = jnp.dot(w_ref[...], col_ref[...], preferred_element_type=jnp.float32)
    acc = acc + b_ref[...]                                 # (OC,1) bcast over M
    o_ref[...] = acc[None].astype(o_ref.dtype)             # (1, OC, M)


def _target_rows():
    """Lane-tile (matmul N) target per TPU generation."""
    try:
        kind = jax.devices()[0].device_kind.lower()
    except Exception:
        return 256
    if any(s in kind for s in ("v5e", "v5 lite", "v5lite", "v4", "v3", "v2")):
        return 128          # 128-wide MXU generations
    return 256              # v6e / v7x: 2x256x256 MXU


def _pick_toh(OH, OW, target_m):
    """TOH dividing OH such that M = TOH*OW is a multiple of 128 and <= target_m
    (largest such); else the smallest 128-multiple; else whole image (a block
    equal to the full dim is always legal)."""
    best_small, best_fit = None, None
    for t in range(1, OH + 1):
        if OH % t:
            continue
        m = t * OW
        if m % 128 == 0:
            if best_small is None:
                best_small = t
            if m <= target_m:
                best_fit = t
    if best_fit is not None:
        return best_fit
    if best_small is not None:
        return best_small
    return OH


def conv2d_pallas(x_nchw, weight_oihw, bias, *, stride=(1, 1), padding=(1, 1),
                  dilation=(1, 1)):
    B, C, H, W = x_nchw.shape
    OC, IC, KH, KW = weight_oihw.shape
    assert IC == C, "groups != 1 not implemented"  # TODO(synk): grouped conv
    sh, sw = stride
    ph, pw = padding
    dh, dw = dilation
    OH = (H + 2 * ph - dh * (KH - 1) - 1) // sh + 1
    OW = (W + 2 * pw - dw * (KW - 1) - 1) // sw + 1

    # Zero pad spatially, stay in NCHW (padding_mode='zeros' semantics).
    x = jnp.pad(x_nchw, ((0, 0), (0, 0), (ph, ph), (pw, pw)))
    Hp, Wp = H + 2 * ph, W + 2 * pw

    # Weight: OIHW -> (OC, KH, KW, IC) -> (OC, KK); row order matches the slab.
    KK = KH * KW * C
    w_mat = jnp.transpose(weight_oihw, (0, 2, 3, 1)).reshape(OC, KK)

    if bias is None:
        bias = jnp.zeros((OC,), jnp.float32)
    b_col = bias.astype(jnp.float32).reshape(OC, 1)

    TOH = _pick_toh(OH, OW, _target_rows())
    nT = OH // TOH
    M = TOH * OW

    kernel = functools.partial(
        _conv2d_kernel, TOH=TOH, OW=OW, C=C, KH=KH, KW=KW,
        sh=sh, sw=sw, dh=dh, dw=dw, M=M)

    out_flat = pl.pallas_call(
        kernel,
        out_shape=jax.ShapeDtypeStruct((B, OC, OH * OW), x_nchw.dtype),
        grid=(B, nT),
        in_specs=[
            # Whole padded image per batch; constant over t -> stays resident.
            pl.BlockSpec((1, C, Hp, Wp), lambda b, t: (b, 0, 0, 0)),
            # Weight matrix and bias column: fetched once, stay resident.
            pl.BlockSpec((OC, KK), lambda b, t: (0, 0)),
            pl.BlockSpec((OC, 1), lambda b, t: (0, 0)),
        ],
        out_specs=pl.BlockSpec((1, OC, M), lambda b, t: (b, 0, t)),
        scratch_shapes=[pltpu.VMEM((KK, M), x.dtype)],      # transposed slab
        compiler_params=pltpu.CompilerParams(
            dimension_semantics=("parallel", "arbitrary"),
            vmem_limit_bytes=32 * 1024 * 1024),
    )(x, w_mat, b_col)

    # Contiguous reshape only (free); output is already NCHW channel-major.
    return out_flat.reshape(B, OC, OH, OW)


if __name__ == "__main__":
    # Module config: Conv2d(in_channels=4, out_channels=8, kernel_size=3,
    #                       stride=1, padding=1, bias=True)
    B, C_in, H, W = 2, 4, 16, 16
    C_out, K = 8, 3
    stride, padding, dilation = (1, 1), (1, 1), (1, 1)

    key = jax.random.PRNGKey(0)
    kx, kw, kb = jax.random.split(key, 3)

    # Kaiming-uniform-style init (matches reset_parameters bounds).
    fan_in = C_in * K * K
    bound = 1.0 / math.sqrt(fan_in)
    weight = jax.random.uniform(kw, (C_out, C_in, K, K), jnp.float32, -bound, bound)
    bias = jax.random.uniform(kb, (C_out,), jnp.float32, -bound, bound)
    x = jax.random.normal(kx, (B, C_in, H, W), jnp.float32)

    out = conv2d_pallas(x, weight, bias, stride=stride, padding=padding,
                        dilation=dilation)
    out = jax.block_until_ready(out)

    # Reference check (plain XLA conv) for correctness.
    ref = jax.lax.conv_general_dilated(
        x, weight, window_strides=stride,
        padding=[(padding[0], padding[0]), (padding[1], padding[1])],
        rhs_dilation=dilation,
        dimension_numbers=("NCHW", "OIHW", "NCHW"),
    ) + bias[None, :, None, None]
    assert out.shape == (B, C_out, H, W)
    assert jnp.allclose(out, ref, atol=1e-4, rtol=1e-4)

    print("KERNEL_OK")
</pallas_src>

<mosaic_0001>
module attributes {stable_mosaic.version = 11 : i64} {
  func.func @_conv2d_kernel(%arg0: i32, %arg1: i32, %arg2: memref<1x4x18x18xf32, #tpu.memory_space<vmem>>, %arg3: memref<8x36xf32, #tpu.memory_space<vmem>>, %arg4: memref<8x1xf32, #tpu.memory_space<vmem>>, %arg5: memref<1x8x256xf32, #tpu.memory_space<vmem>>, %arg6: memref<36x256xf32, #tpu.memory_space<vmem>>) attributes {dimension_semantics = [#tpu.dimension_semantics<parallel>, #tpu.dimension_semantics<arbitrary>], iteration_bounds = array<i64: 2, 1>, scalar_prefetch = 0 : i64, scratch_operands = 1 : i64, tpu.core_type = #tpu.core_type<tc>, window_params = [{transform_indices = @transform_0, window_bounds = array<i64: 1, 4, 18, 18>}, {pipeline_mode = #tpu.pipeline_mode<synchronous>, transform_indices = @transform_1, window_bounds = array<i64: 8, 36>}, {pipeline_mode = #tpu.pipeline_mode<synchronous>, transform_indices = @transform_2, window_bounds = array<i64: 8, 1>}, {transform_indices = @transform_3, window_bounds = array<i64: 1, 8, 256>}]} {
    %c16_i32 = arith.constant 16 : i32
    %0 = arith.muli %arg1, %c16_i32 : i32
    %c1_i32 = arith.constant 1 : i32
    %1 = arith.muli %0, %c1_i32 : i32
    %c0_i32 = arith.constant 0 : i32
    %2 = arith.addi %1, %c0_i32 : i32
    %c0 = arith.constant 0 : index
    %c0_0 = arith.constant 0 : index
    %3 = arith.index_cast %2 : i32 to index
    %c0_1 = arith.constant 0 : index
    %4 = vector.load %arg2[%c0, %c0_0, %3, %c0_1] : memref<1x4x18x18xf32, #tpu.memory_space<vmem>>, vector<1x4x16x16xf32>
    %5 = vector.shape_cast %4 : vector<1x4x16x16xf32> to vector<4x16x16xf32>
    %6 = vector.shape_cast %5 : vector<4x16x16xf32> to vector<4x256xf32>
    %c0_2 = arith.constant 0 : index
    %c0_3 = arith.constant 0 : index
    %7 = vector.load %arg6[%c0_2, %c0_3] : memref<36x256xf32, #tpu.memory_space<vmem>>, vector<4x256xf32>
    tpu.vector_store %arg6[%c0_2, %c0_3], %6 {strides = array<i32>} : memref<36x256xf32, #tpu.memory_space<vmem>>, vector<4x256xf32>,
    %c1_i32_4 = arith.constant 1 : i32
    %8 = arith.muli %0, %c1_i32_4 : i32
    %c0_i32_5 = arith.constant 0 : i32
    %9 = arith.addi %8, %c0_i32_5 : i32
    %c0_6 = arith.constant 0 : index
    %c0_7 = arith.constant 0 : index
    %10 = arith.index_cast %9 : i32 to index
    %c1 = arith.constant 1 : index
    %11 = vector.load %arg2[%c0_6, %c0_7, %10, %c1] : memref<1x4x18x18xf32, #tpu.memory_space<vmem>>, vector<1x4x16x16xf32>
    %12 = vector.shape_cast %11 : vector<1x4x16x16xf32> to vector<4x16x16xf32>
    %13 = vector.shape_cast %12 : vector<4x16x16xf32> to vector<4x256xf32>
    %c4 = arith.constant 4 : index
    %c0_8 = arith.constant 0 : index
    %14 = vector.load %arg6[%c4, %c0_8] : memref<36x256xf32, #tpu.memory_space<vmem>>, vector<4x256xf32>
    tpu.vector_store %arg6[%c4, %c0_8], %13 {strides = array<i32>} : memref<36x256xf32, #tpu.memory_space<vmem>>, vector<4x256xf32>,
    %c1_i32_9 = arith.constant 1 : i32
    %15 = arith.muli %0, %c1_i32_9 : i32
    %c0_i32_10 = arith.constant 0 : i32
    %16 = arith.addi %15, %c0_i32_10 : i32
    %c0_11 = arith.constant 0 : index
    %c0_12 = arith.constant 0 : index
    %17 = arith.index_cast %16 : i32 to index
    %c2 = arith.constant 2 : index
    %18 = vector.load %arg2[%c0_11, %c0_12, %17, %c2] : memref<1x4x18x18xf32, #tpu.memory_space<vmem>>, vector<1x4x16x16xf32>
    %19 = vector.shape_cast %18 : vector<1x4x16x16xf32> to vector<4x16x16xf32>
    %20 = vector.shape_cast %19 : vector<4x16x16xf32> to vector<4x256xf32>
    %c8 = arith.constant 8 : index
    %c0_13 = arith.constant 0 : index
    %21 = vector.load %arg6[%c8, %c0_13] : memref<36x256xf32, #tpu.memory_space<vmem>>, vector<4x256xf32>
    tpu.vector_store %arg6[%c8, %c0_13], %20 {strides = array<i32>} : memref<36x256xf32, #tpu.memory_space<vmem>>, vector<4x256xf32>,
    %c1_i32_14 = arith.constant 1 : i32
    %22 = arith.muli %0, %c1_i32_14 : i32
    %c1_i32_15 = arith.constant 1 : i32
    %23 = arith.addi %22, %c1_i32_15 : i32
    %c0_16 = arith.constant 0 : index
    %c0_17 = arith.constant 0 : index
    %24 = arith.index_cast %23 : i32 to index
    %c0_18 = arith.constant 0 : index
    %25 = vector.load %arg2[%c0_16, %c0_17, %24, %c0_18] : memref<1x4x18x18xf32, #tpu.memory_space<vmem>>, vector<1x4x16x16xf32>
    %26 = vector.shape_cast %25 : vector<1x4x16x16xf32> to vector<4x16x16xf32>
    %27 = vector.shape_cast %26 : vector<4x16x16xf32> to vector<4x256xf32>
    %c12 = arith.constant 12 : index
    %c0_19 = arith.constant 0 : index
    %28 = vector.load %arg6[%c12, %c0_19] : memref<36x256xf32, #tpu.memory_space<vmem>>, vector<4x256xf32>
    tpu.vector_store %arg6[%c12, %c0_19], %27 {strides = array<i32>} : memref<36x256xf32, #tpu.memory_space<vmem>>, vector<4x256xf32>,
    %c1_i32_20 = arith.constant 1 : i32
    %29 = arith.muli %0, %c1_i32_20 : i32
    %c1_i32_21 = arith.constant 1 : i32
    %30 = arith.addi %29, %c1_i32_21 : i32
    %c0_22 = arith.constant 0 : index
    %c0_23 = arith.constant 0 : index
    %31 = arith.index_cast %30 : i32 to index
    %c1_24 = arith.constant 1 : index
    %32 = vector.load %arg2[%c0_22, %c0_23, %31, %c1_24] : memref<1x4x18x18xf32, #tpu.memory_space<vmem>>, vector<1x4x16x16xf32>
    %33 = vector.shape_cast %32 : vector<1x4x16x16xf32> to vector<4x16x16xf32>
    %34 = vector.shape_cast %33 : vector<4x16x16xf32> to vector<4x256xf32>
    %c16 = arith.constant 16 : index
    %c0_25 = arith.constant 0 : index
    %35 = vector.load %arg6[%c16, %c0_25] : memref<36x256xf32, #tpu.memory_space<vmem>>, vector<4x256xf32>
    tpu.vector_store %arg6[%c16, %c0_25], %34 {strides = array<i32>} : memref<36x256xf32, #tpu.memory_space<vmem>>, vector<4x256xf32>,
    %c1_i32_26 = arith.constant 1 : i32
    %36 = arith.muli %0, %c1_i32_26 : i32
    %c1_i32_27 = arith.constant 1 : i32
    %37 = arith.addi %36, %c1_i32_27 : i32
    %c0_28 = arith.constant 0 : index
    %c0_29 = arith.constant 0 : index
    %38 = arith.index_cast %37 : i32 to index
    %c2_30 = arith.constant 2 : index
    %39 = vector.load %arg2[%c0_28, %c0_29, %38, %c2_30] : memref<1x4x18x18xf32, #tpu.memory_space<vmem>>, vector<1x4x16x16xf32>
    %40 = vector.shape_cast %39 : vector<1x4x16x16xf32> to vector<4x16x16xf32>
    %41 = vector.shape_cast %40 : vector<4x16x16xf32> to vector<4x256xf32>
    %c20 = arith.constant 20 : index
    %c0_31 = arith.constant 0 : index
    %42 = vector.load %arg6[%c20, %c0_31] : memref<36x256xf32, #tpu.memory_space<vmem>>, vector<4x256xf32>
    tpu.vector_store %arg6[%c20, %c0_31], %41 {strides = array<i32>} : memref<36x256xf32, #tpu.memory_space<vmem>>, vector<4x256xf32>,
    %c1_i32_32 = arith.constant 1 : i32
    %43 = arith.muli %0, %c1_i32_32 : i32
    %c2_i32 = arith.constant 2 : i32
    %44 = arith.addi %43, %c2_i32 : i32
    %c0_33 = arith.constant 0 : index
    %c0_34 = arith.constant 0 : index
    %45 = arith.index_cast %44 : i32 to index
    %c0_35 = arith.constant 0 : index
    %46 = vector.load %arg2[%c0_33, %c0_34, %45, %c0_35] : memref<1x4x18x18xf32, #tpu.memory_space<vmem>>, vector<1x4x16x16xf32>
    %47 = vector.shape_cast %46 : vector<1x4x16x16xf32> to vector<4x16x16xf32>
    %48 = vector.shape_cast %47 : vector<4x16x16xf32> to vector<4x256xf32>
    %c24 = arith.constant 24 : index
    %c0_36 = arith.constant 0 : index
    %49 = vector.load %arg6[%c24, %c0_36] : memref<36x256xf32, #tpu.memory_space<vmem>>, vector<4x256xf32>
    tpu.vector_store %arg6[%c24, %c0_36], %48 {strides = array<i32>} : memref<36x256xf32, #tpu.memory_space<vmem>>, vector<4x256xf32>,
    %c1_i32_37 = arith.constant 1 : i32
    %50 = arith.muli %0, %c1_i32_37 : i32
    %c2_i32_38 = arith.constant 2 : i32
    %51 = arith.addi %50, %c2_i32_38 : i32
    %c0_39 = arith.constant 0 : index
    %c0_40 = arith.constant 0 : index
    %52 = arith.index_cast %51 : i32 to index
    %c1_41 = arith.constant 1 : index
    %53 = vector.load %arg2[%c0_39, %c0_40, %52, %c1_41] : memref<1x4x18x18xf32, #tpu.memory_space<vmem>>, vector<1x4x16x16xf32>
    %54 = vector.shape_cast %53 : vector<1x4x16x16xf32> to vector<4x16x16xf32>
    %55 = vector.shape_cast %54 : vector<4x16x16xf32> to vector<4x256xf32>
    %c28 = arith.constant 28 : index
    %c0_42 = arith.constant 0 : index
    %56 = vector.load %arg6[%c28, %c0_42] : memref<36x256xf32, #tpu.memory_space<vmem>>, vector<4x256xf32>
    tpu.vector_store %arg6[%c28, %c0_42], %55 {strides = array<i32>} : memref<36x256xf32, #tpu.memory_space<vmem>>, vector<4x256xf32>,
    %c1_i32_43 = arith.constant 1 : i32
    %57 = arith.muli %0, %c1_i32_43 : i32
    %c2_i32_44 = arith.constant 2 : i32
    %58 = arith.addi %57, %c2_i32_44 : i32
    %c0_45 = arith.constant 0 : index
    %c0_46 = arith.constant 0 : index
    %59 = arith.index_cast %58 : i32 to index
    %c2_47 = arith.constant 2 : index
    %60 = vector.load %arg2[%c0_45, %c0_46, %59, %c2_47] : memref<1x4x18x18xf32, #tpu.memory_space<vmem>>, vector<1x4x16x16xf32>
    %61 = vector.shape_cast %60 : vector<1x4x16x16xf32> to vector<4x16x16xf32>
    %62 = vector.shape_cast %61 : vector<4x16x16xf32> to vector<4x256xf32>
    %c32 = arith.constant 32 : index
    %c0_48 = arith.constant 0 : index
    %63 = vector.load %arg6[%c32, %c0_48] : memref<36x256xf32, #tpu.memory_space<vmem>>, vector<4x256xf32>
    tpu.vector_store %arg6[%c32, %c0_48], %62 {strides = array<i32>} : memref<36x256xf32, #tpu.memory_space<vmem>>, vector<4x256xf32>,
    %c0_49 = arith.constant 0 : index
    %c0_50 = arith.constant 0 : index
    %64 = vector.load %arg3[%c0_49, %c0_50] : memref<8x36xf32, #tpu.memory_space<vmem>>, vector<8x36xf32>
    %c0_51 = arith.constant 0 : index
    %c0_52 = arith.constant 0 : index
    %65 = vector.load %arg6[%c0_51, %c0_52] : memref<36x256xf32, #tpu.memory_space<vmem>>, vector<36x256xf32>
    %cst = arith.constant dense<0.000000e+00> : vector<8x256xf32>
    %66 = tpu.matmul %64, %65, %cst {dimension_numbers = #tpu.dot_dimension_numbers<[1], [0], [0], [1], [0, 0, 1, 1], [], []>} : vector<8x36xf32>, vector<36x256xf32>, vector<8x256xf32> -> vector<8x256xf32>
    %c0_53 = arith.constant 0 : index
    %c0_54 = arith.constant 0 : index
    %67 = vector.load %arg4[%c0_53, %c0_54] : memref<8x1xf32, #tpu.memory_space<vmem>>, vector<8x1xf32>
    %68 = vector.broadcast %67 : vector<8x1xf32> to vector<8x256xf32>
    %69 = arith.addf %66, %68 : vector<8x256xf32>
    %70 = vector.shape_cast %69 : vector<8x256xf32> to vector<1x8x256xf32>
    %c0_55 = arith.constant 0 : index
    %c0_56 = arith.constant 0 : index
    %c0_57 = arith.constant 0 : index
    %71 = vector.load %arg5[%c0_55, %c0_56, %c0_57] : memref<1x8x256xf32, #tpu.memory_space<vmem>>, vector<1x8x256xf32>
    tpu.vector_store %arg5[%c0_55, %c0_56, %c0_57], %70 {strides = array<i32>} : memref<1x8x256xf32, #tpu.memory_space<vmem>>, vector<1x8x256xf32>,
    return
  }
  func.func @transform_0(%arg0: i32, %arg1: i32) -> (i32, i32, i32, i32) {
    %c0_i32 = arith.constant 0 : i32
    %c0_i32_0 = arith.constant 0 : i32
    %c0_i32_1 = arith.constant 0 : i32
    %c0_i32_2 = arith.constant 0 : i32
    return %arg0, %c0_i32, %c0_i32_0, %c0_i32_1 : i32, i32, i32, i32
  }
  func.func @transform_1(%arg0: i32, %arg1: i32) -> (i32, i32) {
    %c0_i32 = arith.constant 0 : i32
    %c0_i32_0 = arith.constant 0 : i32
    %c0_i32_1 = arith.constant 0 : i32
    return %c0_i32, %c0_i32_0 : i32, i32
  }
  func.func @transform_2(%arg0: i32, %arg1: i32) -> (i32, i32) {
    %c0_i32 = arith.constant 0 : i32
    %c0_i32_0 = arith.constant 0 : i32
    %c0_i32_1 = arith.constant 0 : i32
    return %c0_i32, %c0_i32_0 : i32, i32
  }
  func.func @transform_3(%arg0: i32, %arg1: i32) -> (i32, i32, i32) {
    %c0_i32 = arith.constant 0 : i32
    %c0_i32_0 = arith.constant 0 : i32
    return %arg0, %c0_i32, %arg1 : i32, i32, i32
  }
}

</mosaic_0001>

<llo_original>
// kernel: tpu_custom_call.1
$region0: #{tpu_custom_call.1}
  #allocation0 [shape = 'u32[]', space=smem, size = 0x4, offset = 0x4, fixed_abs, tag = 'smem constant byte address 0x4 - core index']
  #allocation1 [shape = 'u32[144,128]{1,0:T(1,128)}', space=vmem, size = 0x12000, scoped, tag = 'internal scratch']
  #allocation2 [shape = 'f32[36,256]{1,0:T(8,128)}', space=vmem, size = 0xa000, scoped, tag = 'scratch operand']
  %s0 = inlined_call_operand.vmem [shape: f32[2,4,18,18], index: 0, kind: input, shape index: {}]
  %s1 = inlined_call_operand.vmem [shape: f32[8,36], index: 1, kind: input, shape index: {}]
  %s2 = inlined_call_operand.vmem [shape: f32[8,1], index: 2, kind: input, shape index: {}]
  %s3 = inlined_call_operand.hbm [shape: f32[2,8,256], index: 3, kind: output, shape index: {}]
  %s4 = sld [smem:[#allocation0]]
  $region45: #{tpu_custom_call.1} parent=0
    _
  %s6 = ssub.s32 1, %s4
  %s7 = scalar_select 0, %s6, %s4
  $region1: #{tpu_custom_call.1} parent=0
    #allocation3 [shape = 'u8[16384]{0}', space=vmem, size = 0x4000, scoped, tag = 'output window, operand 0']
    #allocation4 [shape = 's32[2]{0}', space=sflag, size = 0x8, scoped, tag = 'scoped memory for tpu_custom_call.1']
    %8 = vsyncpa [#allocation4], 0
    %s9 = scalar_lea.sflag [#allocation4], 1
    %10 = vsyncpa %s9, 0
    loop: start=0, step=1, limit=4
    $region2: #{tpu_custom_call.1} parent=1 // loop_pre_header
      _
    $region3: #{tpu_custom_call.1} parent=1 // loop_header
      %s12 = sphi 0, %s16
      %p13 = scmp.ge.s32.totalorder %s12, 4
      %s19 = sphi 0, %s31
      %s20 = sphi 0, %s27
      %s21 = sphi 0, %s19
      %s22 = sphi 0, %s20
      %s23 = sphi 0, %s21
      %s24 = sphi 0, %s22
      %s34 = sphi 0, %s36
      %s37 = sphi 0, %s34
      %s38 = sphi 0, %s37
      %s54 = sphi 0, %s38
      %s58 = sphi 0, %s58
      %s60 = sphi 0, %s58
      %s61 = sphi 0, %s60
      %s75 = sphi 0, %s61
      %s79 = sphi 0, %s79
      %s81 = sphi 0, %s79
      %s82 = sphi 0, %s81
      %s96 = sphi 0, %s82
      %s104 = sphi 0, %s106
      %s107 = sphi 0, %s104
      %s108 = sphi 0, %s107
      %s124 = sphi 0, %s108
    $region4: #{tpu_custom_call.1} parent=1 // loop_header_branch
      %15 = sbr.rel (%p13) target = $region8
    $region5: #{tpu_custom_call.1} parent=1 // loop_body
      %s17 = ssub.s32 %s12, 1
      %s18 = ssub.s32 %s12, 2
      %s25 = sadd.s32 1, %s20
      %p26 = scmp.ge.s32.totalorder %s25, 1
      %s27 = scalar_select %p26, 0, %s25
      %s28 = sadd.s32 1, %s19
      %s29 = scalar_select %p26, %s28, %s19
      %p30 = scmp.ge.s32.totalorder %s29, 2
      %s31 = scalar_select %p30, 0, %s29
      %s32 = ssub.s32 %s19, %s31
      %p33 = scmp.eq.s32.totalorder %s32, 0
      %s35 = sadd.s32 %s34, 1
      %s36 = scalar_select %p33, %s34, %s35
      %p39 = pneg %p33
      %p40 = scmp.eq.s32.totalorder %s12, 1
      %p41 = por %p39, %p40
      %p42 = scmp.ne.s32.totalorder %s34, %s37
      %p43 = scmp.eq.s32.totalorder %s12, 0
      %p44 = por %p42, %p43
      %p45 = scmp.ne.s32.totalorder %s34, %s37
      %p46 = scmp.eq.s32.totalorder %s17, 1
      %p47 = por %p45, %p46
      %p48 = scmp.ne.s32.totalorder %s37, %s38
      %p49 = scmp.eq.s32.totalorder %s17, 0
      %p50 = por %p48, %p49
      %p51 = scmp.ne.s32.totalorder %s37, %s38
      %p52 = scmp.eq.s32.totalorder %s18, 1
      %p53 = por %p51, %p52
      %p55 = scmp.ne.s32.totalorder %s38, %s54
      %p56 = scmp.eq.s32.totalorder %s18, 0
      %p57 = por %p55, %p56
      %s59 = sadd.s32 %s58, 1
      %p62 = scmp.eq.s32.totalorder %s12, 1
      %p63 = scmp.ne.s32.totalorder %s58, %s60
      %p64 = scmp.eq.s32.totalorder %s12, 0
      %p65 = por %p63, %p64
      %p66 = scmp.ne.s32.totalorder %s58, %s60
      %p67 = scmp.eq.s32.totalorder %s17, 1
      %p68 = por %p66, %p67
      %p69 = scmp.ne.s32.totalorder %s60, %s61
      %p70 = scmp.eq.s32.totalorder %s17, 0
      %p71 = por %p69, %p70
      %p72 = scmp.ne.s32.totalorder %s60, %s61
      %p73 = scmp.eq.s32.totalorder %s18, 1
      %p74 = por %p72, %p73
      %p76 = scmp.ne.s32.totalorder %s61, %s75
      %p77 = scmp.eq.s32.totalorder %s18, 0
      %p78 = por %p76, %p77
      %s80 = sadd.s32 %s79, 1
      %p83 = scmp.eq.s32.totalorder %s12, 1
      %p84 = scmp.ne.s32.totalorder %s79, %s81
      %p85 = scmp.eq.s32.totalorder %s12, 0
      %p86 = por %p84, %p85
      %p87 = scmp.ne.s32.totalorder %s79, %s81
      %p88 = scmp.eq.s32.totalorder %s17, 1
      %p89 = por %p87, %p88
      %p90 = scmp.ne.s32.totalorder %s81, %s82
      %p91 = scmp.eq.s32.totalorder %s17, 0
      %p92 = por %p90, %p91
      %p93 = scmp.ne.s32.totalorder %s81, %s82
      %p94 = scmp.eq.s32.totalorder %s18, 1
      %p95 = por %p93, %p94
      %p97 = scmp.ne.s32.totalorder %s82, %s96
      %p98 = scmp.eq.s32.totalorder %s18, 0
      %p99 = por %p97, %p98
      %s100 = ssub.s32 %s19, %s31
      %s101 = ssub.s32 %s20, %s27
      %s102 = sor.u32 %s100, %s101
      %p103 = scmp.eq.s32.totalorder %s102, 0
      %s105 = sadd.s32 %s104, 1
      %s106 = scalar_select %p103, %s104, %s105
      %p109 = pneg %p103
      %p110 = scmp.eq.s32.totalorder %s12, 1
      %p111 = por %p109, %p110
      %p112 = scmp.ne.s32.totalorder %s104, %s107
      %p113 = scmp.eq.s32.totalorder %s12, 0
      %p114 = por %p112, %p113
      %p115 = scmp.ne.s32.totalorder %s104, %s107
      %p116 = scmp.eq.s32.totalorder %s17, 1
      %p117 = por %p115, %p116
      %p118 = scmp.ne.s32.totalorder %s107, %s108
      %p119 = scmp.eq.s32.totalorder %s17, 0
      %p120 = por %p118, %p119
      %p121 = scmp.ne.s32.totalorder %s107, %s108
      %p122 = scmp.eq.s32.totalorder %s18, 1
      %p123 = por %p121, %p122
      %p125 = scmp.ne.s32.totalorder %s108, %s124
      %p126 = scmp.eq.s32.totalorder %s18, 0
      %p127 = por %p125, %p126
      %p128 = scmp.le.s32.totalorder 1, %s12
      %p129 = scmp.lt.s32.totalorder %s12, 3
      %p130 = pnand %p128, %p129
      %p131 = pneg %p130
      // Predicated region
      $region9: #{tpu_custom_call.1} parent=5 // pred_check
        _
      $region10: #{tpu_custom_call.1} parent=5 // pred_check_branch
        %133 = sbr.rel (%p130) target = $region12
      $region11: #{tpu_custom_call.1} parent=5 // pred_region
        %s134 = ssub.s32 %s12, 1
        // Predicated region
        $region13: #{tpu_custom_call.1} parent=11 // pred_check
          %p135 = pneg %p71
        $region14: #{tpu_custom_call.1} parent=11 // pred_check_branch
          %137 = sbr.rel (%p135) target = $region16
        $region15: #{tpu_custom_call.1} parent=11 // pred_region
          _
        $region16: #{tpu_custom_call.1} parent=11 // pred_fallthru
          _
        // Predicated region
        $region17: #{tpu_custom_call.1} parent=11 // pred_check
          %p138 = pneg %p92
        $region18: #{tpu_custom_call.1} parent=11 // pred_check_branch
          %140 = sbr.rel (%p138) target = $region20
        $region19: #{tpu_custom_call.1} parent=11 // pred_region
          _
        $region20: #{tpu_custom_call.1} parent=11 // pred_fallthru
          _
      $region12: #{tpu_custom_call.1} parent=5 // pred_fallthru
        _
      %p141 = scmp.lt.s32.totalorder %s12, 2
      // Predicated region
      $region21: #{tpu_custom_call.1} parent=5 // pred_check
        %p142 = pneg %p141
      $region22: #{tpu_custom_call.1} parent=5 // pred_check_branch
        %144 = sbr.rel (%p142) target = $region24
      $region23: #{tpu_custom_call.1} parent=5 // pred_region
        // Predicated region
        $region25: #{tpu_custom_call.1} parent=23 // pred_check
          %p145 = pneg %p44
        $region26: #{tpu_custom_call.1} parent=23 // pred_check_branch
          %147 = sbr.rel (%p145) target = $region28
        $region27: #{tpu_custom_call.1} parent=23 // pred_region
          %p148 = scmp.lt.s32.totalorder %s19, 1
          %s149 = scalar_select %p148, %s19, 1
          %s150 = smul.addr %s149, 12
          %s151 = smul.addr %s150, 8
          %s152 = scalar_lea.vmem %s0, %s151
        $region28: #{tpu_custom_call.1} parent=23 // pred_fallthru
          _
      $region24: #{tpu_custom_call.1} parent=5 // pred_fallthru
        _
      %p153 = scmp.le.s32.totalorder 1, %s12
      %p154 = scmp.lt.s32.totalorder %s12, 3
      %p155 = pnand %p153, %p154
      %p156 = pneg %p155
      // Predicated region
      $region29: #{tpu_custom_call.1} parent=5 // pred_check
        _
      $region30: #{tpu_custom_call.1} parent=5 // pred_check_branch
        %158 = sbr.rel (%p155) target = $region32
      $region31: #{tpu_custom_call.1} parent=5 // pred_region
        %s159 = ssub.s32 %s12, 1
        %p160 = scmp.lt.s32.totalorder %s21, 1
        %s161 = scalar_select %p160, %s21, 1
        %s162 = smul.addr %s161, 12
        %s163 = smul.addr %s162, 8
        %s164 = scalar_lea.vmem %s0, %s163
        %p165 = pneg %p50
        %p166 = pneg %p47
        %p167 = pneg %p71
        %p168 = pneg %p68
        %p169 = pneg %p92
        %p170 = pneg %p89
        %p171 = pneg %p120
        %p172 = pneg %p117
        %s173 = sand.u32 %s107, 1
        %s174 = scalar_lea.sflag [#allocation4], %s173
        %s175 = sand.u32 %s107, 1
        %s176 = smul.addr %s175, 16
        %s177 = scalar_lea.vmem [#allocation3], %s176
        %p178 = scmp.lt.s32.totalorder %s21, 1
        %s179 = scalar_select %p178, %s21, 1
        %s180 = smul.addr %s179, 12
        %s181 = smul.addr %s180, 8
        %s182 = scalar_lea.vmem %s0, %s181
        %s183 = smul.u32 2, %s22
        %s184 = smul.u32 %s22, 16
        %s185 = scalar_lea.vmem %s182, %s184
        %v186 = vld [vmem:[%s185] sm:$0xff]
        %v187 = vld [vmem:[%s185 + $0x8] sm:$0xff]
        %v188 = vld [vmem:[%s185 + $0x18] sm:$0xff]
        %v189 = vld [vmem:[%s185 + $0x20] sm:$0xff]
        %v190 = vld [vmem:[%s185 + $0x30] sm:$0xff]
        %v191 = vld [vmem:[%s185 + $0x38] sm:$0xff]
        %v192 = vld [vmem:[%s185 + $0x48] sm:$0xff]
        %v193 = vld [vmem:[%s185 + $0x50] sm:$0xff]
        %v194 = vcombine.low %v186, %v190
        %v195 = vcombine.high %v186, %v190
        %v197 = vunpack.c.l.s4 1983009808
        %v198 = vunpack.c.0.s8 %v197
        %v199 = vlaneseq
        %v200 = vshrl.u32 %v199, 7
        %v201 = vsub.s32 %v198, %v200
        %v202 = vrot.slane %v194, %v201
        %v204 = vunpack.c.l.s4 1983009808
        %v205 = vunpack.c.0.s8 %v204
        %v206 = vlaneseq
        %v207 = vshrl.u32 %v206, 7
        %v208 = vsub.s32 %v205, %v207
        %v209 = vrot.slane %v195, %v208
        %v210 = vcombine.low %v188, %v192
        %v211 = vcombine.high %v188, %v192
        %v213 = vunpack.c.l.s4 1983009808
        %v214 = vunpack.c.0.s8 %v213
        %v215 = vlaneseq
        %v216 = vshrl.u32 %v215, 7
        %v217 = vsub.s32 %v214, %v216
        %v218 = vrot.slane %v210, %v217
        %v220 = vunpack.c.l.s4 1983009808
        %v221 = vunpack.c.0.s8 %v220
        %v222 = vlaneseq
        %v223 = vshrl.u32 %v222, 7
        %v224 = vsub.s32 %v221, %v223
        %v225 = vrot.slane %v211, %v224
        %v226 = vcombine.low %v202, %v218
        %v227 = vcombine.high %v202, %v218
        %v229 = vunpack.c.l.s4 1934713408
        %v230 = vunpack.c.0.s8 %v229
        %v231 = vlaneseq
        %v232 = vshrl.u32 %v231, 7
        %v233 = vsub.s32 %v230, %v232
        %v234 = vrot.slane %v226, %v233
        %v236 = vunpack.c.l.s4 1934713408
        %v237 = vunpack.c.0.s8 %v236
        %v238 = vlaneseq
        %v239 = vshrl.u32 %v238, 7
        %v240 = vsub.s32 %v237, %v239
        %v241 = vrot.slane %v227, %v240
        %v242 = vcombine.low %v209, %v225
        %v243 = vcombine.high %v209, %v225
        %v245 = vunpack.c.l.s4 1934713408
        %v246 = vunpack.c.0.s8 %v245
        %v247 = vlaneseq
        %v248 = vshrl.u32 %v247, 7
        %v249 = vsub.s32 %v246, %v248
        %v250 = vrot.slane %v242, %v249
        %v252 = vunpack.c.l.s4 1934713408
        %v253 = vunpack.c.0.s8 %v252
        %v254 = vlaneseq
        %v255 = vshrl.u32 %v254, 7
        %v256 = vsub.s32 %v253, %v255
        %v257 = vrot.slane %v243, %v256
        %v258 = vcombine.high %v234, 0.0
        %v259 = vcombine.high %v241, 0.0
        %v260 = vcombine.high %v250, 0.0
        %v261 = vcombine.high %v257, 0.0
        %v262 = vcombine.low %v187, %v191
        %v263 = vcombine.high %v187, %v191
        %v265 = vunpack.c.l.s4 1983009808
        %v266 = vunpack.c.0.s8 %v265
        %v267 = vlaneseq
        %v268 = vshrl.u32 %v267, 7
        %v269 = vsub.s32 %v266, %v268
        %v270 = vrot.slane %v262, %v269
        %v272 = vunpack.c.l.s4 1983009808
        %v273 = vunpack.c.0.s8 %v272
        %v274 = vlaneseq
        %v275 = vshrl.u32 %v274, 7
        %v276 = vsub.s32 %v273, %v275
        %v277 = vrot.slane %v263, %v276
        %v278 = vcombine.low %v189, %v193
        %v279 = vcombine.high %v189, %v193
        %v281 = vunpack.c.l.s4 1983009808
        %v282 = vunpack.c.0.s8 %v281
        %v283 = vlaneseq
        %v284 = vshrl.u32 %v283, 7
        %v285 = vsub.s32 %v282, %v284
        %v286 = vrot.slane %v278, %v285
        %v288 = vunpack.c.l.s4 1983009808
        %v289 = vunpack.c.0.s8 %v288
        %v290 = vlaneseq
        %v291 = vshrl.u32 %v290, 7
        %v292 = vsub.s32 %v289, %v291
        %v293 = vrot.slane %v279, %v292
        %v294 = vcombine.low %v270, %v286
        %v295 = vcombine.high %v270, %v286
        %v297 = vunpack.c.l.s4 1934713408
        %v298 = vunpack.c.0.s8 %v297
        %v299 = vlaneseq
        %v300 = vshrl.u32 %v299, 7
        %v301 = vsub.s32 %v298, %v300
        %v302 = vrot.slane %v294, %v301
        %v304 = vunpack.c.l.s4 1934713408
        %v305 = vunpack.c.0.s8 %v304
        %v306 = vlaneseq
        %v307 = vshrl.u32 %v306, 7
        %v308 = vsub.s32 %v305, %v307
        %v309 = vrot.slane %v295, %v308
        %v310 = vcombine.low %v277, %v293
        %v311 = vcombine.high %v277, %v293
        %v313 = vunpack.c.l.s4 1934713408
        %v314 = vunpack.c.0.s8 %v313
        %v315 = vlaneseq
        %v316 = vshrl.u32 %v315, 7
        %v317 = vsub.s32 %v314, %v316
        %v318 = vrot.slane %v310, %v317
        %v320 = vunpack.c.l.s4 1934713408
        %v321 = vunpack.c.0.s8 %v320
        %v322 = vlaneseq
        %v323 = vshrl.u32 %v322, 7
        %v324 = vsub.s32 %v321, %v323
        %v325 = vrot.slane %v311, %v324
        %v326 = vcombine.high %v302, 0.0
        %v327 = vcombine.high %v309, 0.0
        %v328 = vcombine.high %v318, 0.0
        %v329 = vcombine.high %v325, 0.0
        %331 = vrot.lane.b32.xlu0 %v258, 16
        %v332 = vpop.permute.xlu0 %331
        %335 = vrot.lane.b32.xlu0 %v241, 32
        %v336 = vpop.permute.xlu0 %335
        %339 = vrot.lane.b32.xlu0 %v259, 48
        %v340 = vpop.permute.xlu0 %339
        %343 = vrot.lane.b32.xlu0 %v250, 64
        %v344 = vpop.permute.xlu0 %343
        %347 = vrot.lane.b32.xlu0 %v260, 80
        %v348 = vpop.permute.xlu0 %347
        %351 = vrot.lane.b32.xlu0 %v257, 96
        %v352 = vpop.permute.xlu0 %351
        %355 = vrot.lane.b32.xlu0 %v261, 112
        %v356 = vpop.permute.xlu0 %355
        %359 = vrot.lane.b32.xlu0 %v326, 16
        %v360 = vpop.permute.xlu0 %359
        %363 = vrot.lane.b32.xlu0 %v309, 32
        %v364 = vpop.permute.xlu0 %363
        %367 = vrot.lane.b32.xlu0 %v327, 48
        %v368 = vpop.permute.xlu0 %367
        %371 = vrot.lane.b32.xlu0 %v318, 64
        %v372 = vpop.permute.xlu0 %371
        %375 = vrot.lane.b32.xlu0 %v328, 80
        %v376 = vpop.permute.xlu0 %375
        %379 = vrot.lane.b32.xlu0 %v325, 96
        %v380 = vpop.permute.xlu0 %379
        %383 = vrot.lane.b32.xlu0 %v329, 112
        %v384 = vpop.permute.xlu0 %383
        %vm386 = vcmask 130048
        %v387 = vsel %vm386, %v234, %v332
        %vm388 = vcmask 261120
        %v389 = vsel %vm388, %v387, %v336
        %vm390 = vcmask 392192
        %v391 = vsel %vm390, %v389, %v340
        %vm392 = vcmask 523264
        %v393 = vsel %vm392, %v391, %v344
        %vm394 = vcmask 654336
        %v395 = vsel %vm394, %v393, %v348
        %vm396 = vcmask 785408
        %v397 = vsel %vm396, %v395, %v352
        %vm398 = vcmask 916480
        %v399 = vsel %vm398, %v397, %v356
        %v400 = vsel %vm386, %v302, %v360
        %v401 = vsel %vm388, %v400, %v364
        %v402 = vsel %vm390, %v401, %v368
        %v403 = vsel %vm392, %v402, %v372
        %v404 = vsel %vm394, %v403, %v376
        %v405 = vsel %vm396, %v404, %v380
        %v406 = vsel %vm398, %v405, %v384
        %407 = vst [vmem:[#allocation2] sm:$0xf] %v399
        %408 = vst [vmem:[#allocation2 + $0x8] sm:$0xf] %v406
        %v409 = vld [vmem:[%s185] sm:$0xff]
        %v410 = vld [vmem:[%s185 + $0x8] sm:$0xff]
        %v411 = vld [vmem:[%s185 + $0x18] sm:$0xff]
        %v412 = vld [vmem:[%s185 + $0x20] sm:$0xff]
        %v413 = vld [vmem:[%s185 + $0x30] sm:$0xff]
        %v414 = vld [vmem:[%s185 + $0x38] sm:$0xff]
        %v415 = vld [vmem:[%s185 + $0x48] sm:$0xff]
        %v416 = vld [vmem:[%s185 + $0x50] sm:$0xff]
        %425 = vrot.lane.b32.xlu0 %v409, 127
        %v426 = vpop.permute.xlu0 %425
        %427 = vrot.lane.b32.xlu0 %v410, 127
        %v428 = vpop.permute.xlu0 %427
        %429 = vrot.lane.b32.xlu0 %v411, 127
        %v430 = vpop.permute.xlu0 %429
        %431 = vrot.lane.b32.xlu0 %v412, 127
        %v432 = vpop.permute.xlu0 %431
        %433 = vrot.lane.b32.xlu0 %v413, 127
        %v434 = vpop.permute.xlu0 %433
        %435 = vrot.lane.b32.xlu0 %v414, 127
        %v436 = vpop.permute.xlu0 %435
        %437 = vrot.lane.b32.xlu0 %v415, 127
        %v438 = vpop.permute.xlu0 %437
        %439 = vrot.lane.b32.xlu0 %v416, 127
        %v440 = vpop.permute.xlu0 %439
        %v449 = vcombine.low %v426, %v434
        %v450 = vcombine.high %v426, %v434
        %v452 = vunpack.c.l.s4 1983009808
        %v453 = vunpack.c.0.s8 %v452
        %v454 = vlaneseq
        %v455 = vshrl.u32 %v454, 7
        %v456 = vsub.s32 %v453, %v455
        %v457 = vrot.slane %v449, %v456
        %v459 = vunpack.c.l.s4 1983009808
        %v460 = vunpack.c.0.s8 %v459
        %v461 = vlaneseq
        %v462 = vshrl.u32 %v461, 7
        %v463 = vsub.s32 %v460, %v462
        %v464 = vrot.slane %v450, %v463
        %v465 = vcombine.low %v430, %v438
        %v466 = vcombine.high %v430, %v438
        %v468 = vunpack.c.l.s4 1983009808
        %v469 = vunpack.c.0.s8 %v468
        %v470 = vlaneseq
        %v471 = vshrl.u32 %v470, 7
        %v472 = vsub.s32 %v469, %v471
        %v473 = vrot.slane %v465, %v472
        %v475 = vunpack.c.l.s4 1983009808
        %v476 = vunpack.c.0.s8 %v475
        %v477 = vlaneseq
        %v478 = vshrl.u32 %v477, 7
        %v479 = vsub.s32 %v476, %v478
        %v480 = vrot.slane %v466, %v479
        %v481 = vcombine.low %v457, %v473
        %v482 = vcombine.high %v457, %v473
        %v484 = vunpack.c.l.s4 1934713408
        %v485 = vunpack.c.0.s8 %v484
        %v486 = vlaneseq
        %v487 = vshrl.u32 %v486, 7
        %v488 = vsub.s32 %v485, %v487
        %v489 = vrot.slane %v481, %v488
        %v491 = vunpack.c.l.s4 1934713408
        %v492 = vunpack.c.0.s8 %v491
        %v493 = vlaneseq
        %v494 = vshrl.u32 %v493, 7
        %v495 = vsub.s32 %v492, %v494
        %v496 = vrot.slane %v482, %v495
        %v497 = vcombine.low %v464, %v480
        %v498 = vcombine.high %v464, %v480
        %v500 = vunpack.c.l.s4 1934713408
        %v501 = vunpack.c.0.s8 %v500
        %v502 = vlaneseq
        %v503 = vshrl.u32 %v502, 7
        %v504 = vsub.s32 %v501, %v503
        %v505 = vrot.slane %v497, %v504
        %v507 = vunpack.c.l.s4 1934713408
        %v508 = vunpack.c.0.s8 %v507
        %v509 = vlaneseq
        %v510 = vshrl.u32 %v509, 7
        %v511 = vsub.s32 %v508, %v510
        %v512 = vrot.slane %v498, %v511
        %v513 = vcombine.high %v489, 0.0
        %v514 = vcombine.high %v496, 0.0
        %v515 = vcombine.high %v505, 0.0
        %v516 = vcombine.high %v512, 0.0
        %v517 = vcombine.low %v428, %v436
        %v518 = vcombine.high %v428, %v436
        %v520 = vunpack.c.l.s4 1983009808
        %v521 = vunpack.c.0.s8 %v520
        %v522 = vlaneseq
        %v523 = vshrl.u32 %v522, 7
        %v524 = vsub.s32 %v521, %v523
        %v525 = vrot.slane %v517, %v524
        %v527 = vunpack.c.l.s4 1983009808
        %v528 = vunpack.c.0.s8 %v527
        %v529 = vlaneseq
        %v530 = vshrl.u32 %v529, 7
        %v531 = vsub.s32 %v528, %v530
        %v532 = vrot.slane %v518, %v531
        %v533 = vcombine.low %v432, %v440
        %v534 = vcombine.high %v432, %v440
        %v536 = vunpack.c.l.s4 1983009808
        %v537 = vunpack.c.0.s8 %v536
        %v538 = vlaneseq
        %v539 = vshrl.u32 %v538, 7
        %v540 = vsub.s32 %v537, %v539
        %v541 = vrot.slane %v533, %v540
        %v543 = vunpack.c.l.s4 1983009808
        %v544 = vunpack.c.0.s8 %v543
        %v545 = vlaneseq
        %v546 = vshrl.u32 %v545, 7
        %v547 = vsub.s32 %v544, %v546
        %v548 = vrot.slane %v534, %v547
        %v549 = vcombine.low %v525, %v541
        %v550 = vcombine.high %v525, %v541
        %v552 = vunpack.c.l.s4 1934713408
        %v553 = vunpack.c.0.s8 %v552
        %v554 = vlaneseq
        %v555 = vshrl.u32 %v554, 7
        %v556 = vsub.s32 %v553, %v555
        %v557 = vrot.slane %v549, %v556
        %v559 = vunpack.c.l.s4 1934713408
        %v560 = vunpack.c.0.s8 %v559
        %v561 = vlaneseq
        %v562 = vshrl.u32 %v561, 7
        %v563 = vsub.s32 %v560, %v562
        %v564 = vrot.slane %v550, %v563
        %v565 = vcombine.low %v532, %v548
        %v566 = vcombine.high %v532, %v548
        %v568 = vunpack.c.l.s4 1934713408
        %v569 = vunpack.c.0.s8 %v568
        %v570 = vlaneseq
        %v571 = vshrl.u32 %v570, 7
        %v572 = vsub.s32 %v569, %v571
        %v573 = vrot.slane %v565, %v572
        %v575 = vunpack.c.l.s4 1934713408
        %v576 = vunpack.c.0.s8 %v575
        %v577 = vlaneseq
        %v578 = vshrl.u32 %v577, 7
        %v579 = vsub.s32 %v576, %v578
        %v580 = vrot.slane %v566, %v579
        %v581 = vcombine.high %v557, 0.0
        %v582 = vcombine.high %v564, 0.0
        %v583 = vcombine.high %v573, 0.0
        %v584 = vcombine.high %v580, 0.0
        %586 = vrot.lane.b32.xlu0 %v513, 16
        %v587 = vpop.permute.xlu0 %586
        %590 = vrot.lane.b32.xlu0 %v496, 32
        %v591 = vpop.permute.xlu0 %590
        %594 = vrot.lane.b32.xlu0 %v514, 48
        %v595 = vpop.permute.xlu0 %594
        %598 = vrot.lane.b32.xlu0 %v505, 64
        %v599 = vpop.permute.xlu0 %598
        %602 = vrot.lane.b32.xlu0 %v515, 80
        %v603 = vpop.permute.xlu0 %602
        %606 = vrot.lane.b32.xlu0 %v512, 96
        %v607 = vpop.permute.xlu0 %606
        %610 = vrot.lane.b32.xlu0 %v516, 112
        %v611 = vpop.permute.xlu0 %610
        %614 = vrot.lane.b32.xlu0 %v581, 16
        %v615 = vpop.permute.xlu0 %614
        %618 = vrot.lane.b32.xlu0 %v564, 32
        %v619 = vpop.permute.xlu0 %618
        %622 = vrot.lane.b32.xlu0 %v582, 48
        %v623 = vpop.permute.xlu0 %622
        %626 = vrot.lane.b32.xlu0 %v573, 64
        %v627 = vpop.permute.xlu0 %626
        %630 = vrot.lane.b32.xlu0 %v583, 80
        %v631 = vpop.permute.xlu0 %630
        %634 = vrot.lane.b32.xlu0 %v580, 96
        %v635 = vpop.permute.xlu0 %634
        %638 = vrot.lane.b32.xlu0 %v584, 112
        %v639 = vpop.permute.xlu0 %638
        %v641 = vsel %vm386, %v489, %v587
        %v642 = vsel %vm388, %v641, %v591
        %v643 = vsel %vm390, %v642, %v595
        %v644 = vsel %vm392, %v643, %v599
        %v645 = vsel %vm394, %v644, %v603
        %v646 = vsel %vm396, %v645, %v607
        %v647 = vsel %vm398, %v646, %v611
        %v648 = vsel %vm386, %v557, %v615
        %v649 = vsel %vm388, %v648, %v619
        %v650 = vsel %vm390, %v649, %v623
        %v651 = vsel %vm392, %v650, %v627
        %v652 = vsel %vm394, %v651, %v631
        %v653 = vsel %vm396, %v652, %v635
        %v654 = vsel %vm398, %v653, %v639
        %v657 = vrot.slane %v647, 4
        %v658 = vrot.slane %v654, 4
        %661 = vst [vmem:[#allocation2] sm:$0xf0] %v657
        %662 = vst [vmem:[#allocation2 + $0x8] sm:$0xf0] %v658
        %v663 = vld [vmem:[%s185] sm:$0xff]
        %v664 = vld [vmem:[%s185 + $0x8] sm:$0xff]
        %v665 = vld [vmem:[%s185 + $0x18] sm:$0xff]
        %v666 = vld [vmem:[%s185 + $0x20] sm:$0xff]
        %v667 = vld [vmem:[%s185 + $0x30] sm:$0xff]
        %v668 = vld [vmem:[%s185 + $0x38] sm:$0xff]
        %v669 = vld [vmem:[%s185 + $0x48] sm:$0xff]
        %v670 = vld [vmem:[%s185 + $0x50] sm:$0xff]
        %679 = vrot.lane.b32.xlu0 %v663, 126
        %v680 = vpop.permute.xlu0 %679
        %681 = vrot.lane.b32.xlu0 %v664, 126
        %v682 = vpop.permute.xlu0 %681
        %683 = vrot.lane.b32.xlu0 %v665, 126
        %v684 = vpop.permute.xlu0 %683
        %685 = vrot.lane.b32.xlu0 %v666, 126
        %v686 = vpop.permute.xlu0 %685
        %687 = vrot.lane.b32.xlu0 %v667, 126
        %v688 = vpop.permute.xlu0 %687
        %689 = vrot.lane.b32.xlu0 %v668, 126
        %v690 = vpop.permute.xlu0 %689
        %691 = vrot.lane.b32.xlu0 %v669, 126
        %v692 = vpop.permute.xlu0 %691
        %693 = vrot.lane.b32.xlu0 %v670, 126
        %v694 = vpop.permute.xlu0 %693
        %v703 = vcombine.low %v680, %v688
        %v704 = vcombine.high %v680, %v688
        %v706 = vunpack.c.l.s4 1983009808
        %v707 = vunpack.c.0.s8 %v706
        %v708 = vlaneseq
        %v709 = vshrl.u32 %v708, 7
        %v710 = vsub.s32 %v707, %v709
        %v711 = vrot.slane %v703, %v710
        %v713 = vunpack.c.l.s4 1983009808
        %v714 = vunpack.c.0.s8 %v713
        %v715 = vlaneseq
        %v716 = vshrl.u32 %v715, 7
        %v717 = vsub.s32 %v714, %v716
        %v718 = vrot.slane %v704, %v717
        %v719 = vcombine.low %v684, %v692
        %v720 = vcombine.high %v684, %v692
        %v722 = vunpack.c.l.s4 1983009808
        %v723 = vunpack.c.0.s8 %v722
        %v724 = vlaneseq
        %v725 = vshrl.u32 %v724, 7
        %v726 = vsub.s32 %v723, %v725
        %v727 = vrot.slane %v719, %v726
        %v729 = vunpack.c.l.s4 1983009808
        %v730 = vunpack.c.0.s8 %v729
        %v731 = vlaneseq
        %v732 = vshrl.u32 %v731, 7
        %v733 = vsub.s32 %v730, %v732
        %v734 = vrot.slane %v720, %v733
        %v735 = vcombine.low %v711, %v727
        %v736 = vcombine.high %v711, %v727
        %v738 = vunpack.c.l.s4 1934713408
        %v739 = vunpack.c.0.s8 %v738
        %v740 = vlaneseq
        %v741 = vshrl.u32 %v740, 7
        %v742 = vsub.s32 %v739, %v741
        %v743 = vrot.slane %v735, %v742
        %v745 = vunpack.c.l.s4 1934713408
        %v746 = vunpack.c.0.s8 %v745
        %v747 = vlaneseq
        %v748 = vshrl.u32 %v747, 7
        %v749 = vsub.s32 %v746, %v748
        %v750 = vrot.slane %v736, %v749
        %v751 = vcombine.low %v718, %v734
        %v752 = vcombine.high %v718, %v734
        %v754 = vunpack.c.l.s4 1934713408
        %v755 = vunpack.c.0.s8 %v754
        %v756 = vlaneseq
        %v757 = vshrl.u32 %v756, 7
        %v758 = vsub.s32 %v755, %v757
        %v759 = vrot.slane %v751, %v758
        %v761 = vunpack.c.l.s4 1934713408
        %v762 = vunpack.c.0.s8 %v761
        %v763 = vlaneseq
        %v764 = vshrl.u32 %v763, 7
        %v765 = vsub.s32 %v762, %v764
        %v766 = vrot.slane %v752, %v765
        %v767 = vcombine.high %v743, 0.0
        %v768 = vcombine.high %v750, 0.0
        %v769 = vcombine.high %v759, 0.0
        %v770 = vcombine.high %v766, 0.0
        %v771 = vcombine.low %v682, %v690
        %v772 = vcombine.high %v682, %v690
        %v774 = vunpack.c.l.s4 1983009808
        %v775 = vunpack.c.0.s8 %v774
        %v776 = vlaneseq
        %v777 = vshrl.u32 %v776, 7
        %v778 = vsub.s32 %v775, %v777
        %v779 = vrot.slane %v771, %v778
        %v781 = vunpack.c.l.s4 1983009808
        %v782 = vunpack.c.0.s8 %v781
        %v783 = vlaneseq
        %v784 = vshrl.u32 %v783, 7
        %v785 = vsub.s32 %v782, %v784
        %v786 = vrot.slane %v772, %v785
        %v787 = vcombine.low %v686, %v694
        %v788 = vcombine.high %v686, %v694
        %v790 = vunpack.c.l.s4 1983009808
        %v791 = vunpack.c.0.s8 %v790
        %v792 = vlaneseq
        %v793 = vshrl.u32 %v792, 7
        %v794 = vsub.s32 %v791, %v793
        %v795 = vrot.slane %v787, %v794
        %v797 = vunpack.c.l.s4 1983009808
        %v798 = vunpack.c.0.s8 %v797
        %v799 = vlaneseq
        %v800 = vshrl.u32 %v799, 7
        %v801 = vsub.s32 %v798, %v800
        %v802 = vrot.slane %v788, %v801
        %v803 = vcombine.low %v779, %v795
        %v804 = vcombine.high %v779, %v795
        %v806 = vunpack.c.l.s4 1934713408
        %v807 = vunpack.c.0.s8 %v806
        %v808 = vlaneseq
        %v809 = vshrl.u32 %v808, 7
        %v810 = vsub.s32 %v807, %v809
        %v811 = vrot.slane %v803, %v810
        %v813 = vunpack.c.l.s4 1934713408
        %v814 = vunpack.c.0.s8 %v813
        %v815 = vlaneseq
        %v816 = vshrl.u32 %v815, 7
        %v817 = vsub.s32 %v814, %v816
        %v818 = vrot.slane %v804, %v817
        %v819 = vcombine.low %v786, %v802
        %v820 = vcombine.high %v786, %v802
        %v822 = vunpack.c.l.s4 1934713408
        %v823 = vunpack.c.0.s8 %v822
        %v824 = vlaneseq
        %v825 = vshrl.u32 %v824, 7
        %v826 = vsub.s32 %v823, %v825
        %v827 = vrot.slane %v819, %v826
        %v829 = vunpack.c.l.s4 1934713408
        %v830 = vunpack.c.0.s8 %v829
        %v831 = vlaneseq
        %v832 = vshrl.u32 %v831, 7
        %v833 = vsub.s32 %v830, %v832
        %v834 = vrot.slane %v820, %v833
        %v835 = vcombine.high %v811, 0.0
        %v836 = vcombine.high %v818, 0.0
        %v837 = vcombine.high %v827, 0.0
        %v838 = vcombine.high %v834, 0.0
        %840 = vrot.lane.b32.xlu0 %v767, 16
        %v841 = vpop.permute.xlu0 %840
        %844 = vrot.lane.b32.xlu0 %v750, 32
        %v845 = vpop.permute.xlu0 %844
        %848 = vrot.lane.b32.xlu0 %v768, 48
        %v849 = vpop.permute.xlu0 %848
        %852 = vrot.lane.b32.xlu0 %v759, 64
        %v853 = vpop.permute.xlu0 %852
        %856 = vrot.lane.b32.xlu0 %v769, 80
        %v857 = vpop.permute.xlu0 %856
        %860 = vrot.lane.b32.xlu0 %v766, 96
        %v861 = vpop.permute.xlu0 %860
        %864 = vrot.lane.b32.xlu0 %v770, 112
        %v865 = vpop.permute.xlu0 %864
        %868 = vrot.lane.b32.xlu0 %v835, 16
        %v869 = vpop.permute.xlu0 %868
        %872 = vrot.lane.b32.xlu0 %v818, 32
        %v873 = vpop.permute.xlu0 %872
        %876 = vrot.lane.b32.xlu0 %v836, 48
        %v877 = vpop.permute.xlu0 %876
        %880 = vrot.lane.b32.xlu0 %v827, 64
        %v881 = vpop.permute.xlu0 %880
        %884 = vrot.lane.b32.xlu0 %v837, 80
        %v885 = vpop.permute.xlu0 %884
        %888 = vrot.lane.b32.xlu0 %v834, 96
        %v889 = vpop.permute.xlu0 %888
        %892 = vrot.lane.b32.xlu0 %v838, 112
        %v893 = vpop.permute.xlu0 %892
        %v895 = vsel %vm386, %v743, %v841
        %v896 = vsel %vm388, %v895, %v845
        %v897 = vsel %vm390, %v896, %v849
        %v898 = vsel %vm392, %v897, %v853
        %v899 = vsel %vm394, %v898, %v857
        %v900 = vsel %vm396, %v899, %v861
        %v901 = vsel %vm398, %v900, %v865
        %v902 = vsel %vm386, %v811, %v869
        %v903 = vsel %vm388, %v902, %v873
        %v904 = vsel %vm390, %v903, %v877
        %v905 = vsel %vm392, %v904, %v881
        %v906 = vsel %vm394, %v905, %v885
        %v907 = vsel %vm396, %v906, %v889
        %v908 = vsel %vm398, %v907, %v893
        %909 = vst [vmem:[#allocation2 + $0x10] sm:$0xf] %v901
        %910 = vst [vmem:[#allocation2 + $0x18] sm:$0xf] %v908
        %s911 = sadd.s32 %s184, 1
        %s912 = scalar_lea.vmem %s182, %s911
        %v913 = vld [vmem:[%s912] sm:$0xff]
        %v914 = vld [vmem:[%s912 + $0x8] sm:$0xff]
        %v915 = vld [vmem:[%s912 + $0x18] sm:$0xff]
        %v916 = vld [vmem:[%s912 + $0x20] sm:$0xff]
        %v917 = vld [vmem:[%s912 + $0x30] sm:$0xff]
        %v918 = vld [vmem:[%s912 + $0x38] sm:$0xff]
        %v919 = vld [vmem:[%s912 + $0x48] sm:$0xff]
        %v920 = vld [vmem:[%s912 + $0x50] sm:$0xff]
        %v921 = vcombine.low %v913, %v917
        %v922 = vcombine.high %v913, %v917
        %v924 = vunpack.c.l.s4 1983009808
        %v925 = vunpack.c.0.s8 %v924
        %v926 = vlaneseq
        %v927 = vshrl.u32 %v926, 7
        %v928 = vsub.s32 %v925, %v927
        %v929 = vrot.slane %v921, %v928
        %v931 = vunpack.c.l.s4 1983009808
        %v932 = vunpack.c.0.s8 %v931
        %v933 = vlaneseq
        %v934 = vshrl.u32 %v933, 7
        %v935 = vsub.s32 %v932, %v934
        %v936 = vrot.slane %v922, %v935
        %v937 = vcombine.low %v915, %v919
        %v938 = vcombine.high %v915, %v919
        %v940 = vunpack.c.l.s4 1983009808
        %v941 = vunpack.c.0.s8 %v940
        %v942 = vlaneseq
        %v943 = vshrl.u32 %v942, 7
        %v944 = vsub.s32 %v941, %v943
        %v945 = vrot.slane %v937, %v944
        %v947 = vunpack.c.l.s4 1983009808
        %v948 = vunpack.c.0.s8 %v947
        %v949 = vlaneseq
        %v950 = vshrl.u32 %v949, 7
        %v951 = vsub.s32 %v948, %v950
        %v952 = vrot.slane %v938, %v951
        %v953 = vcombine.low %v929, %v945
        %v954 = vcombine.high %v929, %v945
        %v956 = vunpack.c.l.s4 1934713408
        %v957 = vunpack.c.0.s8 %v956
        %v958 = vlaneseq
        %v959 = vshrl.u32 %v958, 7
        %v960 = vsub.s32 %v957, %v959
        %v961 = vrot.slane %v953, %v960
        %v963 = vunpack.c.l.s4 1934713408
        %v964 = vunpack.c.0.s8 %v963
        %v965 = vlaneseq
        %v966 = vshrl.u32 %v965, 7
        %v967 = vsub.s32 %v964, %v966
        %v968 = vrot.slane %v954, %v967
        %v969 = vcombine.low %v936, %v952
        %v970 = vcombine.high %v936, %v952
        %v972 = vunpack.c.l.s4 1934713408
        %v973 = vunpack.c.0.s8 %v972
        %v974 = vlaneseq
        %v975 = vshrl.u32 %v974, 7
        %v976 = vsub.s32 %v973, %v975
        %v977 = vrot.slane %v969, %v976
        %v979 = vunpack.c.l.s4 1934713408
        %v980 = vunpack.c.0.s8 %v979
        %v981 = vlaneseq
        %v982 = vshrl.u32 %v981, 7
        %v983 = vsub.s32 %v980, %v982
        %v984 = vrot.slane %v970, %v983
        %v985 = vcombine.high %v961, 0.0
        %v986 = vcombine.high %v968, 0.0
        %v987 = vcombine.high %v977, 0.0
        %v988 = vcombine.high %v984, 0.0
        %v989 = vcombine.low %v914, %v918
        %v990 = vcombine.high %v914, %v918
        %v992 = vunpack.c.l.s4 1983009808
        %v993 = vunpack.c.0.s8 %v992
        %v994 = vlaneseq
        %v995 = vshrl.u32 %v994, 7
        %v996 = vsub.s32 %v993, %v995
        %v997 = vrot.slane %v989, %v996
        %v999 = vunpack.c.l.s4 1983009808
        %v1000 = vunpack.c.0.s8 %v999
        %v1001 = vlaneseq
        %v1002 = vshrl.u32 %v1001, 7
        %v1003 = vsub.s32 %v1000, %v1002
        %v1004 = vrot.slane %v990, %v1003
        %v1005 = vcombine.low %v916, %v920
        %v1006 = vcombine.high %v916, %v920
        %v1008 = vunpack.c.l.s4 1983009808
        %v1009 = vunpack.c.0.s8 %v1008
        %v1010 = vlaneseq
        %v1011 = vshrl.u32 %v1010, 7
        %v1012 = vsub.s32 %v1009, %v1011
        %v1013 = vrot.slane %v1005, %v1012
        %v1015 = vunpack.c.l.s4 1983009808
        %v1016 = vunpack.c.0.s8 %v1015
        %v1017 = vlaneseq
        %v1018 = vshrl.u32 %v1017, 7
        %v1019 = vsub.s32 %v1016, %v1018
        %v1020 = vrot.slane %v1006, %v1019
        %v1021 = vcombine.low %v997, %v1013
        %v1022 = vcombine.high %v997, %v1013
        %v1024 = vunpack.c.l.s4 1934713408
        %v1025 = vunpack.c.0.s8 %v1024
        %v1026 = vlaneseq
        %v1027 = vshrl.u32 %v1026, 7
        %v1028 = vsub.s32 %v1025, %v1027
        %v1029 = vrot.slane %v1021, %v1028
        %v1031 = vunpack.c.l.s4 1934713408
        %v1032 = vunpack.c.0.s8 %v1031
        %v1033 = vlaneseq
        %v1034 = vshrl.u32 %v1033, 7
        %v1035 = vsub.s32 %v1032, %v1034
        %v1036 = vrot.slane %v1022, %v1035
        %v1037 = vcombine.low %v1004, %v1020
        %v1038 = vcombine.high %v1004, %v1020
        %v1040 = vunpack.c.l.s4 1934713408
        %v1041 = vunpack.c.0.s8 %v1040
        %v1042 = vlaneseq
        %v1043 = vshrl.u32 %v1042, 7
        %v1044 = vsub.s32 %v1041, %v1043
        %v1045 = vrot.slane %v1037, %v1044
        %v1047 = vunpack.c.l.s4 1934713408
        %v1048 = vunpack.c.0.s8 %v1047
        %v1049 = vlaneseq
        %v1050 = vshrl.u32 %v1049, 7
        %v1051 = vsub.s32 %v1048, %v1050
        %v1052 = vrot.slane %v1038, %v1051
        %v1053 = vcombine.high %v1029, 0.0
        %v1054 = vcombine.high %v1036, 0.0
        %v1055 = vcombine.high %v1045, 0.0
        %v1056 = vcombine.high %v1052, 0.0
        %1058 = vrot.lane.b32.xlu0 %v985, 16
        %v1059 = vpop.permute.xlu0 %1058
        %1062 = vrot.lane.b32.xlu0 %v968, 32
        %v1063 = vpop.permute.xlu0 %1062
        %1066 = vrot.lane.b32.xlu0 %v986, 48
        %v1067 = vpop.permute.xlu0 %1066
        %1070 = vrot.lane.b32.xlu0 %v977, 64
        %v1071 = vpop.permute.xlu0 %1070
        %1074 = vrot.lane.b32.xlu0 %v987, 80
        %v1075 = vpop.permute.xlu0 %1074
        %1078 = vrot.lane.b32.xlu0 %v984, 96
        %v1079 = vpop.permute.xlu0 %1078
        %1082 = vrot.lane.b32.xlu0 %v988, 112
        %v1083 = vpop.permute.xlu0 %1082
        %1086 = vrot.lane.b32.xlu0 %v1053, 16
        %v1087 = vpop.permute.xlu0 %1086
        %1090 = vrot.lane.b32.xlu0 %v1036, 32
        %v1091 = vpop.permute.xlu0 %1090
        %1094 = vrot.lane.b32.xlu0 %v1054, 48
        %v1095 = vpop.permute.xlu0 %1094
        %1098 = vrot.lane.b32.xlu0 %v1045, 64
        %v1099 = vpop.permute.xlu0 %1098
        %1102 = vrot.lane.b32.xlu0 %v1055, 80
        %v1103 = vpop.permute.xlu0 %1102
        %1106 = vrot.lane.b32.xlu0 %v1052, 96
        %v1107 = vpop.permute.xlu0 %1106
        %1110 = vrot.lane.b32.xlu0 %v1056, 112
        %v1111 = vpop.permute.xlu0 %1110
        %v1113 = vsel %vm386, %v961, %v1059
        %v1114 = vsel %vm388, %v1113, %v1063
        %v1115 = vsel %vm390, %v1114, %v1067
        %v1116 = vsel %vm392, %v1115, %v1071
        %v1117 = vsel %vm394, %v1116, %v1075
        %v1118 = vsel %vm396, %v1117, %v1079
        %v1119 = vsel %vm398, %v1118, %v1083
        %v1120 = vsel %vm386, %v1029, %v1087
        %v1121 = vsel %vm388, %v1120, %v1091
        %v1122 = vsel %vm390, %v1121, %v1095
        %v1123 = vsel %vm392, %v1122, %v1099
        %v1124 = vsel %vm394, %v1123, %v1103
        %v1125 = vsel %vm396, %v1124, %v1107
        %v1126 = vsel %vm398, %v1125, %v1111
        %v1129 = vrot.slane %v1119, 4
        %v1130 = vrot.slane %v1126, 4
        %1133 = vst [vmem:[#allocation2 + $0x10] sm:$0xf0] %v1129
        %1134 = vst [vmem:[#allocation2 + $0x18] sm:$0xf0] %v1130
        %v1135 = vld [vmem:[%s912] sm:$0xff]
        %v1136 = vld [vmem:[%s912 + $0x8] sm:$0xff]
        %v1137 = vld [vmem:[%s912 + $0x18] sm:$0xff]
        %v1138 = vld [vmem:[%s912 + $0x20] sm:$0xff]
        %v1139 = vld [vmem:[%s912 + $0x30] sm:$0xff]
        %v1140 = vld [vmem:[%s912 + $0x38] sm:$0xff]
        %v1141 = vld [vmem:[%s912 + $0x48] sm:$0xff]
        %v1142 = vld [vmem:[%s912 + $0x50] sm:$0xff]
        %1151 = vrot.lane.b32.xlu0 %v1135, 127
        %v1152 = vpop.permute.xlu0 %1151
        %1153 = vrot.lane.b32.xlu0 %v1136, 127
        %v1154 = vpop.permute.xlu0 %1153
        %1155 = vrot.lane.b32.xlu0 %v1137, 127
        %v1156 = vpop.permute.xlu0 %1155
        %1157 = vrot.lane.b32.xlu0 %v1138, 127
        %v1158 = vpop.permute.xlu0 %1157
        %1159 = vrot.lane.b32.xlu0 %v1139, 127
        %v1160 = vpop.permute.xlu0 %1159
        %1161 = vrot.lane.b32.xlu0 %v1140, 127
        %v1162 = vpop.permute.xlu0 %1161
        %1163 = vrot.lane.b32.xlu0 %v1141, 127
        %v1164 = vpop.permute.xlu0 %1163
        %1165 = vrot.lane.b32.xlu0 %v1142, 127
        %v1166 = vpop.permute.xlu0 %1165
        %v1175 = vcombine.low %v1152, %v1160
        %v1176 = vcombine.high %v1152, %v1160
        %v1178 = vunpack.c.l.s4 1983009808
        %v1179 = vunpack.c.0.s8 %v1178
        %v1180 = vlaneseq
        %v1181 = vshrl.u32 %v1180, 7
        %v1182 = vsub.s32 %v1179, %v1181
        %v1183 = vrot.slane %v1175, %v1182
        %v1185 = vunpack.c.l.s4 1983009808
        %v1186 = vunpack.c.0.s8 %v1185
        %v1187 = vlaneseq
        %v1188 = vshrl.u32 %v1187, 7
        %v1189 = vsub.s32 %v1186, %v1188
        %v1190 = vrot.slane %v1176, %v1189
        %v1191 = vcombine.low %v1156, %v1164
        %v1192 = vcombine.high %v1156, %v1164
        %v1194 = vunpack.c.l.s4 1983009808
        %v1195 = vunpack.c.0.s8 %v1194
        %v1196 = vlaneseq
        %v1197 = vshrl.u32 %v1196, 7
        %v1198 = vsub.s32 %v1195, %v1197
        %v1199 = vrot.slane %v1191, %v1198
        %v1201 = vunpack.c.l.s4 1983009808
        %v1202 = vunpack.c.0.s8 %v1201
        %v1203 = vlaneseq
        %v1204 = vshrl.u32 %v1203, 7
        %v1205 = vsub.s32 %v1202, %v1204
        %v1206 = vrot.slane %v1192, %v1205
        %v1207 = vcombine.low %v1183, %v1199
        %v1208 = vcombine.high %v1183, %v1199
        %v1210 = vunpack.c.l.s4 1934713408
        %v1211 = vunpack.c.0.s8 %v1210
        %v1212 = vlaneseq
        %v1213 = vshrl.u32 %v1212, 7
        %v1214 = vsub.s32 %v1211, %v1213
        %v1215 = vrot.slane %v1207, %v1214
        %v1217 = vunpack.c.l.s4 1934713408
        %v1218 = vunpack.c.0.s8 %v1217
        %v1219 = vlaneseq
        %v1220 = vshrl.u32 %v1219, 7
        %v1221 = vsub.s32 %v1218, %v1220
        %v1222 = vrot.slane %v1208, %v1221
        %v1223 = vcombine.low %v1190, %v1206
        %v1224 = vcombine.high %v1190, %v1206
        %v1226 = vunpack.c.l.s4 1934713408
        %v1227 = vunpack.c.0.s8 %v1226
        %v1228 = vlaneseq
        %v1229 = vshrl.u32 %v1228, 7
        %v1230 = vsub.s32 %v1227, %v1229
        %v1231 = vrot.slane %v1223, %v1230
        %v1233 = vunpack.c.l.s4 1934713408
        %v1234 = vunpack.c.0.s8 %v1233
        %v1235 = vlaneseq
        %v1236 = vshrl.u32 %v1235, 7
        %v1237 = vsub.s32 %v1234, %v1236
        %v1238 = vrot.slane %v1224, %v1237
        %v1239 = vcombine.high %v1215, 0.0
        %v1240 = vcombine.high %v1222, 0.0
        %v1241 = vcombine.high %v1231, 0.0
        %v1242 = vcombine.high %v1238, 0.0
        %v1243 = vcombine.low %v1154, %v1162
        %v1244 = vcombine.high %v1154, %v1162
        %v1246 = vunpack.c.l.s4 1983009808
        %v1247 = vunpack.c.0.s8 %v1246
        %v1248 = vlaneseq
        %v1249 = vshrl.u32 %v1248, 7
        %v1250 = vsub.s32 %v1247, %v1249
        %v1251 = vrot.slane %v1243, %v1250
        %v1253 = vunpack.c.l.s4 1983009808
        %v1254 = vunpack.c.0.s8 %v1253
        %v1255 = vlaneseq
        %v1256 = vshrl.u32 %v1255, 7
        %v1257 = vsub.s32 %v1254, %v1256
        %v1258 = vrot.slane %v1244, %v1257
        %v1259 = vcombine.low %v1158, %v1166
        %v1260 = vcombine.high %v1158, %v1166
        %v1262 = vunpack.c.l.s4 1983009808
        %v1263 = vunpack.c.0.s8 %v1262
        %v1264 = vlaneseq
        %v1265 = vshrl.u32 %v1264, 7
        %v1266 = vsub.s32 %v1263, %v1265
        %v1267 = vrot.slane %v1259, %v1266
        %v1269 = vunpack.c.l.s4 1983009808
        %v1270 = vunpack.c.0.s8 %v1269
        %v1271 = vlaneseq
        %v1272 = vshrl.u32 %v1271, 7
        %v1273 = vsub.s32 %v1270, %v1272
        %v1274 = vrot.slane %v1260, %v1273
        %v1275 = vcombine.low %v1251, %v1267
        %v1276 = vcombine.high %v1251, %v1267
        %v1278 = vunpack.c.l.s4 1934713408
        %v1279 = vunpack.c.0.s8 %v1278
        %v1280 = vlaneseq
        %v1281 = vshrl.u32 %v1280, 7
        %v1282 = vsub.s32 %v1279, %v1281
        %v1283 = vrot.slane %v1275, %v1282
        %v1285 = vunpack.c.l.s4 1934713408
        %v1286 = vunpack.c.0.s8 %v1285
        %v1287 = vlaneseq
        %v1288 = vshrl.u32 %v1287, 7
        %v1289 = vsub.s32 %v1286, %v1288
        %v1290 = vrot.slane %v1276, %v1289
        %v1291 = vcombine.low %v1258, %v1274
        %v1292 = vcombine.high %v1258, %v1274
        %v1294 = vunpack.c.l.s4 1934713408
        %v1295 = vunpack.c.0.s8 %v1294
        %v1296 = vlaneseq
        %v1297 = vshrl.u32 %v1296, 7
        %v1298 = vsub.s32 %v1295, %v1297
        %v1299 = vrot.slane %v1291, %v1298
        %v1301 = vunpack.c.l.s4 1934713408
        %v1302 = vunpack.c.0.s8 %v1301
        %v1303 = vlaneseq
        %v1304 = vshrl.u32 %v1303, 7
        %v1305 = vsub.s32 %v1302, %v1304
        %v1306 = vrot.slane %v1292, %v1305
        %v1307 = vcombine.high %v1283, 0.0
        %v1308 = vcombine.high %v1290, 0.0
        %v1309 = vcombine.high %v1299, 0.0
        %v1310 = vcombine.high %v1306, 0.0
        %1312 = vrot.lane.b32.xlu0 %v1239, 16
        %v1313 = vpop.permute.xlu0 %1312
        %1316 = vrot.lane.b32.xlu0 %v1222, 32
        %v1317 = vpop.permute.xlu0 %1316
        %1320 = vrot.lane.b32.xlu0 %v1240, 48
        %v1321 = vpop.permute.xlu0 %1320
        %1324 = vrot.lane.b32.xlu0 %v1231, 64
        %v1325 = vpop.permute.xlu0 %1324
        %1328 = vrot.lane.b32.xlu0 %v1241, 80
        %v1329 = vpop.permute.xlu0 %1328
        %1332 = vrot.lane.b32.xlu0 %v1238, 96
        %v1333 = vpop.permute.xlu0 %1332
        %1336 = vrot.lane.b32.xlu0 %v1242, 112
        %v1337 = vpop.permute.xlu0 %1336
        %1340 = vrot.lane.b32.xlu0 %v1307, 16
        %v1341 = vpop.permute.xlu0 %1340
        %1344 = vrot.lane.b32.xlu0 %v1290, 32
        %v1345 = vpop.permute.xlu0 %1344
        %1348 = vrot.lane.b32.xlu0 %v1308, 48
        %v1349 = vpop.permute.xlu0 %1348
        %1352 = vrot.lane.b32.xlu0 %v1299, 64
        %v1353 = vpop.permute.xlu0 %1352
        %1356 = vrot.lane.b32.xlu0 %v1309, 80
        %v1357 = vpop.permute.xlu0 %1356
        %1360 = vrot.lane.b32.xlu0 %v1306, 96
        %v1361 = vpop.permute.xlu0 %1360
        %1364 = vrot.lane.b32.xlu0 %v1310, 112
        %v1365 = vpop.permute.xlu0 %1364
        %v1367 = vsel %vm386, %v1215, %v1313
        %v1368 = vsel %vm388, %v1367, %v1317
        %v1369 = vsel %vm390, %v1368, %v1321
        %v1370 = vsel %vm392, %v1369, %v1325
        %v1371 = vsel %vm394, %v1370, %v1329
        %v1372 = vsel %vm396, %v1371, %v1333
        %v1373 = vsel %vm398, %v1372, %v1337
        %v1374 = vsel %vm386, %v1283, %v1341
        %v1375 = vsel %vm388, %v1374, %v1345
        %v1376 = vsel %vm390, %v1375, %v1349
        %v1377 = vsel %vm392, %v1376, %v1353
        %v1378 = vsel %vm394, %v1377, %v1357
        %v1379 = vsel %vm396, %v1378, %v1361
        %v1380 = vsel %vm398, %v1379, %v1365
        %1381 = vst [vmem:[#allocation2 + $0x20] sm:$0xf] %v1373
        %1382 = vst [vmem:[#allocation2 + $0x28] sm:$0xf] %v1380
        %v1383 = vld [vmem:[%s912] sm:$0xff]
        %v1384 = vld [vmem:[%s912 + $0x8] sm:$0xff]
        %v1385 = vld [vmem:[%s912 + $0x18] sm:$0xff]
        %v1386 = vld [vmem:[%s912 + $0x20] sm:$0xff]
        %v1387 = vld [vmem:[%s912 + $0x30] sm:$0xff]
        %v1388 = vld [vmem:[%s912 + $0x38] sm:$0xff]
        %v1389 = vld [vmem:[%s912 + $0x48] sm:$0xff]
        %v1390 = vld [vmem:[%s912 + $0x50] sm:$0xff]
        %1399 = vrot.lane.b32.xlu0 %v1383, 126
        %v1400 = vpop.permute.xlu0 %1399
        %1401 = vrot.lane.b32.xlu0 %v1384, 126
        %v1402 = vpop.permute.xlu0 %1401
        %1403 = vrot.lane.b32.xlu0 %v1385, 126
        %v1404 = vpop.permute.xlu0 %1403
        %1405 = vrot.lane.b32.xlu0 %v1386, 126
        %v1406 = vpop.permute.xlu0 %1405
        %1407 = vrot.lane.b32.xlu0 %v1387, 126
        %v1408 = vpop.permute.xlu0 %1407
        %1409 = vrot.lane.b32.xlu0 %v1388, 126
        %v1410 = vpop.permute.xlu0 %1409
        %1411 = vrot.lane.b32.xlu0 %v1389, 126
        %v1412 = vpop.permute.xlu0 %1411
        %1413 = vrot.lane.b32.xlu0 %v1390, 126
        %v1414 = vpop.permute.xlu0 %1413
        %v1423 = vcombine.low %v1400, %v1408
        %v1424 = vcombine.high %v1400, %v1408
        %v1426 = vunpack.c.l.s4 1983009808
        %v1427 = vunpack.c.0.s8 %v1426
        %v1428 = vlaneseq
        %v1429 = vshrl.u32 %v1428, 7
        %v1430 = vsub.s32 %v1427, %v1429
        %v1431 = vrot.slane %v1423, %v1430
        %v1433 = vunpack.c.l.s4 1983009808
        %v1434 = vunpack.c.0.s8 %v1433
        %v1435 = vlaneseq
        %v1436 = vshrl.u32 %v1435, 7
        %v1437 = vsub.s32 %v1434, %v1436
        %v1438 = vrot.slane %v1424, %v1437
        %v1439 = vcombine.low %v1404, %v1412
        %v1440 = vcombine.high %v1404, %v1412
        %v1442 = vunpack.c.l.s4 1983009808
        %v1443 = vunpack.c.0.s8 %v1442
        %v1444 = vlaneseq
        %v1445 = vshrl.u32 %v1444, 7
        %v1446 = vsub.s32 %v1443, %v1445
        %v1447 = vrot.slane %v1439, %v1446
        %v1449 = vunpack.c.l.s4 1983009808
        %v1450 = vunpack.c.0.s8 %v1449
        %v1451 = vlaneseq
        %v1452 = vshrl.u32 %v1451, 7
        %v1453 = vsub.s32 %v1450, %v1452
        %v1454 = vrot.slane %v1440, %v1453
        %v1455 = vcombine.low %v1431, %v1447
        %v1456 = vcombine.high %v1431, %v1447
        %v1458 = vunpack.c.l.s4 1934713408
        %v1459 = vunpack.c.0.s8 %v1458
        %v1460 = vlaneseq
        %v1461 = vshrl.u32 %v1460, 7
        %v1462 = vsub.s32 %v1459, %v1461
        %v1463 = vrot.slane %v1455, %v1462
        %v1465 = vunpack.c.l.s4 1934713408
        %v1466 = vunpack.c.0.s8 %v1465
        %v1467 = vlaneseq
        %v1468 = vshrl.u32 %v1467, 7
        %v1469 = vsub.s32 %v1466, %v1468
        %v1470 = vrot.slane %v1456, %v1469
        %v1471 = vcombine.low %v1438, %v1454
        %v1472 = vcombine.high %v1438, %v1454
        %v1474 = vunpack.c.l.s4 1934713408
        %v1475 = vunpack.c.0.s8 %v1474
        %v1476 = vlaneseq
        %v1477 = vshrl.u32 %v1476, 7
        %v1478 = vsub.s32 %v1475, %v1477
        %v1479 = vrot.slane %v1471, %v1478
        %v1481 = vunpack.c.l.s4 1934713408
        %v1482 = vunpack.c.0.s8 %v1481
        %v1483 = vlaneseq
        %v1484 = vshrl.u32 %v1483, 7
        %v1485 = vsub.s32 %v1482, %v1484
        %v1486 = vrot.slane %v1472, %v1485
        %v1487 = vcombine.high %v1463, 0.0
        %v1488 = vcombine.high %v1470, 0.0
        %v1489 = vcombine.high %v1479, 0.0
        %v1490 = vcombine.high %v1486, 0.0
        %v1491 = vcombine.low %v1402, %v1410
        %v1492 = vcombine.high %v1402, %v1410
        %v1494 = vunpack.c.l.s4 1983009808
        %v1495 = vunpack.c.0.s8 %v1494
        %v1496 = vlaneseq
        %v1497 = vshrl.u32 %v1496, 7
        %v1498 = vsub.s32 %v1495, %v1497
        %v1499 = vrot.slane %v1491, %v1498
        %v1501 = vunpack.c.l.s4 1983009808
        %v1502 = vunpack.c.0.s8 %v1501
        %v1503 = vlaneseq
        %v1504 = vshrl.u32 %v1503, 7
        %v1505 = vsub.s32 %v1502, %v1504
        %v1506 = vrot.slane %v1492, %v1505
        %v1507 = vcombine.low %v1406, %v1414
        %v1508 = vcombine.high %v1406, %v1414
        %v1510 = vunpack.c.l.s4 1983009808
        %v1511 = vunpack.c.0.s8 %v1510
        %v1512 = vlaneseq
        %v1513 = vshrl.u32 %v1512, 7
        %v1514 = vsub.s32 %v1511, %v1513
        %v1515 = vrot.slane %v1507, %v1514
        %v1517 = vunpack.c.l.s4 1983009808
        %v1518 = vunpack.c.0.s8 %v1517
        %v1519 = vlaneseq
        %v1520 = vshrl.u32 %v1519, 7
        %v1521 = vsub.s32 %v1518, %v1520
        %v1522 = vrot.slane %v1508, %v1521
        %v1523 = vcombine.low %v1499, %v1515
        %v1524 = vcombine.high %v1499, %v1515
        %v1526 = vunpack.c.l.s4 1934713408
        %v1527 = vunpack.c.0.s8 %v1526
        %v1528 = vlaneseq
        %v1529 = vshrl.u32 %v1528, 7
        %v1530 = vsub.s32 %v1527, %v1529
        %v1531 = vrot.slane %v1523, %v1530
        %v1533 = vunpack.c.l.s4 1934713408
        %v1534 = vunpack.c.0.s8 %v1533
        %v1535 = vlaneseq
        %v1536 = vshrl.u32 %v1535, 7
        %v1537 = vsub.s32 %v1534, %v1536
        %v1538 = vrot.slane %v1524, %v1537
        %v1539 = vcombine.low %v1506, %v1522
        %v1540 = vcombine.high %v1506, %v1522
        %v1542 = vunpack.c.l.s4 1934713408
        %v1543 = vunpack.c.0.s8 %v1542
        %v1544 = vlaneseq
        %v1545 = vshrl.u32 %v1544, 7
        %v1546 = vsub.s32 %v1543, %v1545
        %v1547 = vrot.slane %v1539, %v1546
        %v1549 = vunpack.c.l.s4 1934713408
        %v1550 = vunpack.c.0.s8 %v1549
        %v1551 = vlaneseq
        %v1552 = vshrl.u32 %v1551, 7
        %v1553 = vsub.s32 %v1550, %v1552
        %v1554 = vrot.slane %v1540, %v1553
        %v1555 = vcombine.high %v1531, 0.0
        %v1556 = vcombine.high %v1538, 0.0
        %v1557 = vcombine.high %v1547, 0.0
        %v1558 = vcombine.high %v1554, 0.0
        %1560 = vrot.lane.b32.xlu0 %v1487, 16
        %v1561 = vpop.permute.xlu0 %1560
        %1564 = vrot.lane.b32.xlu0 %v1470, 32
        %v1565 = vpop.permute.xlu0 %1564
        %1568 = vrot.lane.b32.xlu0 %v1488, 48
        %v1569 = vpop.permute.xlu0 %1568
        %1572 = vrot.lane.b32.xlu0 %v1479, 64
        %v1573 = vpop.permute.xlu0 %1572
        %1576 = vrot.lane.b32.xlu0 %v1489, 80
        %v1577 = vpop.permute.xlu0 %1576
        %1580 = vrot.lane.b32.xlu0 %v1486, 96
        %v1581 = vpop.permute.xlu0 %1580
        %1584 = vrot.lane.b32.xlu0 %v1490, 112
        %v1585 = vpop.permute.xlu0 %1584
        %1588 = vrot.lane.b32.xlu0 %v1555, 16
        %v1589 = vpop.permute.xlu0 %1588
        %1592 = vrot.lane.b32.xlu0 %v1538, 32
        %v1593 = vpop.permute.xlu0 %1592
        %1596 = vrot.lane.b32.xlu0 %v1556, 48
        %v1597 = vpop.permute.xlu0 %1596
        %1600 = vrot.lane.b32.xlu0 %v1547, 64
        %v1601 = vpop.permute.xlu0 %1600
        %1604 = vrot.lane.b32.xlu0 %v1557, 80
        %v1605 = vpop.permute.xlu0 %1604
        %1608 = vrot.lane.b32.xlu0 %v1554, 96
        %v1609 = vpop.permute.xlu0 %1608
        %1612 = vrot.lane.b32.xlu0 %v1558, 112
        %v1613 = vpop.permute.xlu0 %1612
        %v1615 = vsel %vm386, %v1463, %v1561
        %v1616 = vsel %vm388, %v1615, %v1565
        %v1617 = vsel %vm390, %v1616, %v1569
        %v1618 = vsel %vm392, %v1617, %v1573
        %v1619 = vsel %vm394, %v1618, %v1577
        %v1620 = vsel %vm396, %v1619, %v1581
        %v1621 = vsel %vm398, %v1620, %v1585
        %v1622 = vsel %vm386, %v1531, %v1589
        %v1623 = vsel %vm388, %v1622, %v1593
        %v1624 = vsel %vm390, %v1623, %v1597
        %v1625 = vsel %vm392, %v1624, %v1601
        %v1626 = vsel %vm394, %v1625, %v1605
        %v1627 = vsel %vm396, %v1626, %v1609
        %v1628 = vsel %vm398, %v1627, %v1613
        %v1631 = vrot.slane %v1621, 4
        %v1632 = vrot.slane %v1628, 4
        %1635 = vst [vmem:[#allocation2 + $0x20] sm:$0xf0] %v1631
        %1636 = vst [vmem:[#allocation2 + $0x28] sm:$0xf0] %v1632
        %s1637 = sadd.s32 %s184, 2
        %s1638 = scalar_lea.vmem %s182, %s1637
        %v1639 = vld [vmem:[%s1638] sm:$0xff]
        %v1640 = vld [vmem:[%s1638 + $0x8] sm:$0xff]
        %v1641 = vld [vmem:[%s1638 + $0x18] sm:$0xff]
        %v1642 = vld [vmem:[%s1638 + $0x20] sm:$0xff]
        %v1643 = vld [vmem:[%s1638 + $0x30] sm:$0xff]
        %v1644 = vld [vmem:[%s1638 + $0x38] sm:$0xff]
        %v1645 = vld [vmem:[%s1638 + $0x48] sm:$0xff]
        %v1646 = vld [vmem:[%s1638 + $0x50] sm:$0xff]
        %v1647 = vcombine.low %v1639, %v1643
        %v1648 = vcombine.high %v1639, %v1643
        %v1650 = vunpack.c.l.s4 1983009808
        %v1651 = vunpack.c.0.s8 %v1650
        %v1652 = vlaneseq
        %v1653 = vshrl.u32 %v1652, 7
        %v1654 = vsub.s32 %v1651, %v1653
        %v1655 = vrot.slane %v1647, %v1654
        %v1657 = vunpack.c.l.s4 1983009808
        %v1658 = vunpack.c.0.s8 %v1657
        %v1659 = vlaneseq
        %v1660 = vshrl.u32 %v1659, 7
        %v1661 = vsub.s32 %v1658, %v1660
        %v1662 = vrot.slane %v1648, %v1661
        %v1663 = vcombine.low %v1641, %v1645
        %v1664 = vcombine.high %v1641, %v1645
        %v1666 = vunpack.c.l.s4 1983009808
        %v1667 = vunpack.c.0.s8 %v1666
        %v1668 = vlaneseq
        %v1669 = vshrl.u32 %v1668, 7
        %v1670 = vsub.s32 %v1667, %v1669
        %v1671 = vrot.slane %v1663, %v1670
        %v1673 = vunpack.c.l.s4 1983009808
        %v1674 = vunpack.c.0.s8 %v1673
        %v1675 = vlaneseq
        %v1676 = vshrl.u32 %v1675, 7
        %v1677 = vsub.s32 %v1674, %v1676
        %v1678 = vrot.slane %v1664, %v1677
        %v1679 = vcombine.low %v1655, %v1671
        %v1680 = vcombine.high %v1655, %v1671
        %v1682 = vunpack.c.l.s4 1934713408
        %v1683 = vunpack.c.0.s8 %v1682
        %v1684 = vlaneseq
        %v1685 = vshrl.u32 %v1684, 7
        %v1686 = vsub.s32 %v1683, %v1685
        %v1687 = vrot.slane %v1679, %v1686
        %v1689 = vunpack.c.l.s4 1934713408
        %v1690 = vunpack.c.0.s8 %v1689
        %v1691 = vlaneseq
        %v1692 = vshrl.u32 %v1691, 7
        %v1693 = vsub.s32 %v1690, %v1692
        %v1694 = vrot.slane %v1680, %v1693
        %v1695 = vcombine.low %v1662, %v1678
        %v1696 = vcombine.high %v1662, %v1678
        %v1698 = vunpack.c.l.s4 1934713408
        %v1699 = vunpack.c.0.s8 %v1698
        %v1700 = vlaneseq
        %v1701 = vshrl.u32 %v1700, 7
        %v1702 = vsub.s32 %v1699, %v1701
        %v1703 = vrot.slane %v1695, %v1702
        %v1705 = vunpack.c.l.s4 1934713408
        %v1706 = vunpack.c.0.s8 %v1705
        %v1707 = vlaneseq
        %v1708 = vshrl.u32 %v1707, 7
        %v1709 = vsub.s32 %v1706, %v1708
        %v1710 = vrot.slane %v1696, %v1709
        %v1711 = vcombine.high %v1687, 0.0
        %v1712 = vcombine.high %v1694, 0.0
        %v1713 = vcombine.high %v1703, 0.0
        %v1714 = vcombine.high %v1710, 0.0
        %v1715 = vcombine.low %v1640, %v1644
        %v1716 = vcombine.high %v1640, %v1644
        %v1718 = vunpack.c.l.s4 1983009808
        %v1719 = vunpack.c.0.s8 %v1718
        %v1720 = vlaneseq
        %v1721 = vshrl.u32 %v1720, 7
        %v1722 = vsub.s32 %v1719, %v1721
        %v1723 = vrot.slane %v1715, %v1722
        %v1725 = vunpack.c.l.s4 1983009808
        %v1726 = vunpack.c.0.s8 %v1725
        %v1727 = vlaneseq
        %v1728 = vshrl.u32 %v1727, 7
        %v1729 = vsub.s32 %v1726, %v1728
        %v1730 = vrot.slane %v1716, %v1729
        %v1731 = vcombine.low %v1642, %v1646
        %v1732 = vcombine.high %v1642, %v1646
        %v1734 = vunpack.c.l.s4 1983009808
        %v1735 = vunpack.c.0.s8 %v1734
        %v1736 = vlaneseq
        %v1737 = vshrl.u32 %v1736, 7
        %v1738 = vsub.s32 %v1735, %v1737
        %v1739 = vrot.slane %v1731, %v1738
        %v1741 = vunpack.c.l.s4 1983009808
        %v1742 = vunpack.c.0.s8 %v1741
        %v1743 = vlaneseq
        %v1744 = vshrl.u32 %v1743, 7
        %v1745 = vsub.s32 %v1742, %v1744
        %v1746 = vrot.slane %v1732, %v1745
        %v1747 = vcombine.low %v1723, %v1739
        %v1748 = vcombine.high %v1723, %v1739
        %v1750 = vunpack.c.l.s4 1934713408
        %v1751 = vunpack.c.0.s8 %v1750
        %v1752 = vlaneseq
        %v1753 = vshrl.u32 %v1752, 7
        %v1754 = vsub.s32 %v1751, %v1753
        %v1755 = vrot.slane %v1747, %v1754
        %v1757 = vunpack.c.l.s4 1934713408
        %v1758 = vunpack.c.0.s8 %v1757
        %v1759 = vlaneseq
        %v1760 = vshrl.u32 %v1759, 7
        %v1761 = vsub.s32 %v1758, %v1760
        %v1762 = vrot.slane %v1748, %v1761
        %v1763 = vcombine.low %v1730, %v1746
        %v1764 = vcombine.high %v1730, %v1746
        %v1766 = vunpack.c.l.s4 1934713408
        %v1767 = vunpack.c.0.s8 %v1766
        %v1768 = vlaneseq
        %v1769 = vshrl.u32 %v1768, 7
        %v1770 = vsub.s32 %v1767, %v1769
        %v1771 = vrot.slane %v1763, %v1770
        %v1773 = vunpack.c.l.s4 1934713408
        %v1774 = vunpack.c.0.s8 %v1773
        %v1775 = vlaneseq
        %v1776 = vshrl.u32 %v1775, 7
        %v1777 = vsub.s32 %v1774, %v1776
        %v1778 = vrot.slane %v1764, %v1777
        %v1779 = vcombine.high %v1755, 0.0
        %v1780 = vcombine.high %v1762, 0.0
        %v1781 = vcombine.high %v1771, 0.0
        %v1782 = vcombine.high %v1778, 0.0
        %1784 = vrot.lane.b32.xlu0 %v1711, 16
        %v1785 = vpop.permute.xlu0 %1784
        %1788 = vrot.lane.b32.xlu0 %v1694, 32
        %v1789 = vpop.permute.xlu0 %1788
        %1792 = vrot.lane.b32.xlu0 %v1712, 48
        %v1793 = vpop.permute.xlu0 %1792
        %1796 = vrot.lane.b32.xlu0 %v1703, 64
        %v1797 = vpop.permute.xlu0 %1796
        %1800 = vrot.lane.b32.xlu0 %v1713, 80
        %v1801 = vpop.permute.xlu0 %1800
        %1804 = vrot.lane.b32.xlu0 %v1710, 96
        %v1805 = vpop.permute.xlu0 %1804
        %1808 = vrot.lane.b32.xlu0 %v1714, 112
        %v1809 = vpop.permute.xlu0 %1808
        %1812 = vrot.lane.b32.xlu0 %v1779, 16
        %v1813 = vpop.permute.xlu0 %1812
        %1816 = vrot.lane.b32.xlu0 %v1762, 32
        %v1817 = vpop.permute.xlu0 %1816
        %1820 = vrot.lane.b32.xlu0 %v1780, 48
        %v1821 = vpop.permute.xlu0 %1820
        %1824 = vrot.lane.b32.xlu0 %v1771, 64
        %v1825 = vpop.permute.xlu0 %1824
        %1828 = vrot.lane.b32.xlu0 %v1781, 80
        %v1829 = vpop.permute.xlu0 %1828
        %1832 = vrot.lane.b32.xlu0 %v1778, 96
        %v1833 = vpop.permute.xlu0 %1832
        %1836 = vrot.lane.b32.xlu0 %v1782, 112
        %v1837 = vpop.permute.xlu0 %1836
        %v1839 = vsel %vm386, %v1687, %v1785
        %v1840 = vsel %vm388, %v1839, %v1789
        %v1841 = vsel %vm390, %v1840, %v1793
        %v1842 = vsel %vm392, %v1841, %v1797
        %v1843 = vsel %vm394, %v1842, %v1801
        %v1844 = vsel %vm396, %v1843, %v1805
        %v1845 = vsel %vm398, %v1844, %v1809
        %v1846 = vsel %vm386, %v1755, %v1813
        %v1847 = vsel %vm388, %v1846, %v1817
        %v1848 = vsel %vm390, %v1847, %v1821
        %v1849 = vsel %vm392, %v1848, %v1825
        %v1850 = vsel %vm394, %v1849, %v1829
        %v1851 = vsel %vm396, %v1850, %v1833
        %v1852 = vsel %vm398, %v1851, %v1837
        %1853 = vst [vmem:[#allocation2 + $0x30] sm:$0xf] %v1845
        %1854 = vst [vmem:[#allocation2 + $0x38] sm:$0xf] %v1852
        %v1855 = vld [vmem:[%s1638] sm:$0xff]
        %v1856 = vld [vmem:[%s1638 + $0x8] sm:$0xff]
        %v1857 = vld [vmem:[%s1638 + $0x18] sm:$0xff]
        %v1858 = vld [vmem:[%s1638 + $0x20] sm:$0xff]
        %v1859 = vld [vmem:[%s1638 + $0x30] sm:$0xff]
        %v1860 = vld [vmem:[%s1638 + $0x38] sm:$0xff]
        %v1861 = vld [vmem:[%s1638 + $0x48] sm:$0xff]
        %v1862 = vld [vmem:[%s1638 + $0x50] sm:$0xff]
        %1871 = vrot.lane.b32.xlu0 %v1855, 127
        %v1872 = vpop.permute.xlu0 %1871
        %1873 = vrot.lane.b32.xlu0 %v1856, 127
        %v1874 = vpop.permute.xlu0 %1873
        %1875 = vrot.lane.b32.xlu0 %v1857, 127
        %v1876 = vpop.permute.xlu0 %1875
        %1877 = vrot.lane.b32.xlu0 %v1858, 127
        %v1878 = vpop.permute.xlu0 %1877
        %1879 = vrot.lane.b32.xlu0 %v1859, 127
        %v1880 = vpop.permute.xlu0 %1879
        %1881 = vrot.lane.b32.xlu0 %v1860, 127
        %v1882 = vpop.permute.xlu0 %1881
        %1883 = vrot.lane.b32.xlu0 %v1861, 127
        %v1884 = vpop.permute.xlu0 %1883
        %1885 = vrot.lane.b32.xlu0 %v1862, 127
        %v1886 = vpop.permute.xlu0 %1885
        %v1895 = vcombine.low %v1872, %v1880
        %v1896 = vcombine.high %v1872, %v1880
        %v1898 = vunpack.c.l.s4 1983009808
        %v1899 = vunpack.c.0.s8 %v1898
        %v1900 = vlaneseq
        %v1901 = vshrl.u32 %v1900, 7
        %v1902 = vsub.s32 %v1899, %v1901
        %v1903 = vrot.slane %v1895, %v1902
        %v1905 = vunpack.c.l.s4 1983009808
        %v1906 = vunpack.c.0.s8 %v1905
        %v1907 = vlaneseq
        %v1908 = vshrl.u32 %v1907, 7
        %v1909 = vsub.s32 %v1906, %v1908
        %v1910 = vrot.slane %v1896, %v1909
        %v1911 = vcombine.low %v1876, %v1884
        %v1912 = vcombine.high %v1876, %v1884
        %v1914 = vunpack.c.l.s4 1983009808
        %v1915 = vunpack.c.0.s8 %v1914
        %v1916 = vlaneseq
        %v1917 = vshrl.u32 %v1916, 7
        %v1918 = vsub.s32 %v1915, %v1917
        %v1919 = vrot.slane %v1911, %v1918
        %v1921 = vunpack.c.l.s4 1983009808
        %v1922 = vunpack.c.0.s8 %v1921
        %v1923 = vlaneseq
        %v1924 = vshrl.u32 %v1923, 7
        %v1925 = vsub.s32 %v1922, %v1924
        %v1926 = vrot.slane %v1912, %v1925
        %v1927 = vcombine.low %v1903, %v1919
        %v1928 = vcombine.high %v1903, %v1919
        %v1930 = vunpack.c.l.s4 1934713408
        %v1931 = vunpack.c.0.s8 %v1930
        %v1932 = vlaneseq
        %v1933 = vshrl.u32 %v1932, 7
        %v1934 = vsub.s32 %v1931, %v1933
        %v1935 = vrot.slane %v1927, %v1934
        %v1937 = vunpack.c.l.s4 1934713408
        %v1938 = vunpack.c.0.s8 %v1937
        %v1939 = vlaneseq
        %v1940 = vshrl.u32 %v1939, 7
        %v1941 = vsub.s32 %v1938, %v1940
        %v1942 = vrot.slane %v1928, %v1941
        %v1943 = vcombine.low %v1910, %v1926
        %v1944 = vcombine.high %v1910, %v1926
        %v1946 = vunpack.c.l.s4 1934713408
        %v1947 = vunpack.c.0.s8 %v1946
        %v1948 = vlaneseq
        %v1949 = vshrl.u32 %v1948, 7
        %v1950 = vsub.s32 %v1947, %v1949
        %v1951 = vrot.slane %v1943, %v1950
        %v1953 = vunpack.c.l.s4 1934713408
        %v1954 = vunpack.c.0.s8 %v1953
        %v1955 = vlaneseq
        %v1956 = vshrl.u32 %v1955, 7
        %v1957 = vsub.s32 %v1954, %v1956
        %v1958 = vrot.slane %v1944, %v1957
        %v1959 = vcombine.high %v1935, 0.0
        %v1960 = vcombine.high %v1942, 0.0
        %v1961 = vcombine.high %v1951, 0.0
        %v1962 = vcombine.high %v1958, 0.0
        %v1963 = vcombine.low %v1874, %v1882
        %v1964 = vcombine.high %v1874, %v1882
        %v1966 = vunpack.c.l.s4 1983009808
        %v1967 = vunpack.c.0.s8 %v1966
        %v1968 = vlaneseq
        %v1969 = vshrl.u32 %v1968, 7
        %v1970 = vsub.s32 %v1967, %v1969
        %v1971 = vrot.slane %v1963, %v1970
        %v1973 = vunpack.c.l.s4 1983009808
        %v1974 = vunpack.c.0.s8 %v1973
        %v1975 = vlaneseq
        %v1976 = vshrl.u32 %v1975, 7
        %v1977 = vsub.s32 %v1974, %v1976
        %v1978 = vrot.slane %v1964, %v1977
        %v1979 = vcombine.low %v1878, %v1886
        %v1980 = vcombine.high %v1878, %v1886
        %v1982 = vunpack.c.l.s4 1983009808
        %v1983 = vunpack.c.0.s8 %v1982
        %v1984 = vlaneseq
        %v1985 = vshrl.u32 %v1984, 7
        %v1986 = vsub.s32 %v1983, %v1985
        %v1987 = vrot.slane %v1979, %v1986
        %v1989 = vunpack.c.l.s4 1983009808
        %v1990 = vunpack.c.0.s8 %v1989
        %v1991 = vlaneseq
        %v1992 = vshrl.u32 %v1991, 7
        %v1993 = vsub.s32 %v1990, %v1992
        %v1994 = vrot.slane %v1980, %v1993
        %v1995 = vcombine.low %v1971, %v1987
        %v1996 = vcombine.high %v1971, %v1987
        %v1998 = vunpack.c.l.s4 1934713408
        %v1999 = vunpack.c.0.s8 %v1998
        %v2000 = vlaneseq
        %v2001 = vshrl.u32 %v2000, 7
        %v2002 = vsub.s32 %v1999, %v2001
        %v2003 = vrot.slane %v1995, %v2002
        %v2005 = vunpack.c.l.s4 1934713408
        %v2006 = vunpack.c.0.s8 %v2005
        %v2007 = vlaneseq
        %v2008 = vshrl.u32 %v2007, 7
        %v2009 = vsub.s32 %v2006, %v2008
        %v2010 = vrot.slane %v1996, %v2009
        %v2011 = vcombine.low %v1978, %v1994
        %v2012 = vcombine.high %v1978, %v1994
        %v2014 = vunpack.c.l.s4 1934713408
        %v2015 = vunpack.c.0.s8 %v2014
        %v2016 = vlaneseq
        %v2017 = vshrl.u32 %v2016, 7
        %v2018 = vsub.s32 %v2015, %v2017
        %v2019 = vrot.slane %v2011, %v2018
        %v2021 = vunpack.c.l.s4 1934713408
        %v2022 = vunpack.c.0.s8 %v2021
        %v2023 = vlaneseq
        %v2024 = vshrl.u32 %v2023, 7
        %v2025 = vsub.s32 %v2022, %v2024
        %v2026 = vrot.slane %v2012, %v2025
        %v2027 = vcombine.high %v2003, 0.0
        %v2028 = vcombine.high %v2010, 0.0
        %v2029 = vcombine.high %v2019, 0.0
        %v2030 = vcombine.high %v2026, 0.0
        %2032 = vrot.lane.b32.xlu0 %v1959, 16
        %v2033 = vpop.permute.xlu0 %2032
        %2036 = vrot.lane.b32.xlu0 %v1942, 32
        %v2037 = vpop.permute.xlu0 %2036
        %2040 = vrot.lane.b32.xlu0 %v1960, 48
        %v2041 = vpop.permute.xlu0 %2040
        %2044 = vrot.lane.b32.xlu0 %v1951, 64
        %v2045 = vpop.permute.xlu0 %2044
        %2048 = vrot.lane.b32.xlu0 %v1961, 80
        %v2049 = vpop.permute.xlu0 %2048
        %2052 = vrot.lane.b32.xlu0 %v1958, 96
        %v2053 = vpop.permute.xlu0 %2052
        %2056 = vrot.lane.b32.xlu0 %v1962, 112
        %v2057 = vpop.permute.xlu0 %2056
        %2060 = vrot.lane.b32.xlu0 %v2027, 16
        %v2061 = vpop.permute.xlu0 %2060
        %2064 = vrot.lane.b32.xlu0 %v2010, 32
        %v2065 = vpop.permute.xlu0 %2064
        %2068 = vrot.lane.b32.xlu0 %v2028, 48
        %v2069 = vpop.permute.xlu0 %2068
        %2072 = vrot.lane.b32.xlu0 %v2019, 64
        %v2073 = vpop.permute.xlu0 %2072
        %2076 = vrot.lane.b32.xlu0 %v2029, 80
        %v2077 = vpop.permute.xlu0 %2076
        %2080 = vrot.lane.b32.xlu0 %v2026, 96
        %v2081 = vpop.permute.xlu0 %2080
        %2084 = vrot.lane.b32.xlu0 %v2030, 112
        %v2085 = vpop.permute.xlu0 %2084
        %v2087 = vsel %vm386, %v1935, %v2033
        %v2088 = vsel %vm388, %v2087, %v2037
        %v2089 = vsel %vm390, %v2088, %v2041
        %v2090 = vsel %vm392, %v2089, %v2045
        %v2091 = vsel %vm394, %v2090, %v2049
        %v2092 = vsel %vm396, %v2091, %v2053
        %v2093 = vsel %vm398, %v2092, %v2057
        %v2094 = vsel %vm386, %v2003, %v2061
        %v2095 = vsel %vm388, %v2094, %v2065
        %v2096 = vsel %vm390, %v2095, %v2069
        %v2097 = vsel %vm392, %v2096, %v2073
        %v2098 = vsel %vm394, %v2097, %v2077
        %v2099 = vsel %vm396, %v2098, %v2081
        %v2100 = vsel %vm398, %v2099, %v2085
        %v2103 = vrot.slane %v2093, 4
        %v2104 = vrot.slane %v2100, 4
        %2107 = vst [vmem:[#allocation2 + $0x30] sm:$0xf0] %v2103
        %2108 = vst [vmem:[#allocation2 + $0x38] sm:$0xf0] %v2104
        %v2109 = vld [vmem:[%s1638] sm:$0xff]
        %v2110 = vld [vmem:[%s1638 + $0x8] sm:$0xff]
        %v2111 = vld [vmem:[%s1638 + $0x18] sm:$0xff]
        %v2112 = vld [vmem:[%s1638 + $0x20] sm:$0xff]
        %v2113 = vld [vmem:[%s1638 + $0x30] sm:$0xff]
        %v2114 = vld [vmem:[%s1638 + $0x38] sm:$0xff]
        %v2115 = vld [vmem:[%s1638 + $0x48] sm:$0xff]
        %v2116 = vld [vmem:[%s1638 + $0x50] sm:$0xff]
        %2125 = vrot.lane.b32.xlu0 %v2109, 126
        %v2126 = vpop.permute.xlu0 %2125
        %2127 = vrot.lane.b32.xlu0 %v2110, 126
        %v2128 = vpop.permute.xlu0 %2127
        %2129 = vrot.lane.b32.xlu0 %v2111, 126
        %v2130 = vpop.permute.xlu0 %2129
        %2131 = vrot.lane.b32.xlu0 %v2112, 126
        %v2132 = vpop.permute.xlu0 %2131
        %2133 = vrot.lane.b32.xlu0 %v2113, 126
        %v2134 = vpop.permute.xlu0 %2133
        %2135 = vrot.lane.b32.xlu0 %v2114, 126
        %v2136 = vpop.permute.xlu0 %2135
        %2137 = vrot.lane.b32.xlu0 %v2115, 126
        %v2138 = vpop.permute.xlu0 %2137
        %2139 = vrot.lane.b32.xlu0 %v2116, 126
        %v2140 = vpop.permute.xlu0 %2139
        %v2149 = vcombine.low %v2126, %v2134
        %v2150 = vcombine.high %v2126, %v2134
        %v2152 = vunpack.c.l.s4 1983009808
        %v2153 = vunpack.c.0.s8 %v2152
        %v2154 = vlaneseq
        %v2155 = vshrl.u32 %v2154, 7
        %v2156 = vsub.s32 %v2153, %v2155
        %v2157 = vrot.slane %v2149, %v2156
        %v2159 = vunpack.c.l.s4 1983009808
        %v2160 = vunpack.c.0.s8 %v2159
        %v2161 = vlaneseq
        %v2162 = vshrl.u32 %v2161, 7
        %v2163 = vsub.s32 %v2160, %v2162
        %v2164 = vrot.slane %v2150, %v2163
        %v2165 = vcombine.low %v2130, %v2138
        %v2166 = vcombine.high %v2130, %v2138
        %v2168 = vunpack.c.l.s4 1983009808
        %v2169 = vunpack.c.0.s8 %v2168
        %v2170 = vlaneseq
        %v2171 = vshrl.u32 %v2170, 7
        %v2172 = vsub.s32 %v2169, %v2171
        %v2173 = vrot.slane %v2165, %v2172
        %v2175 = vunpack.c.l.s4 1983009808
        %v2176 = vunpack.c.0.s8 %v2175
        %v2177 = vlaneseq
        %v2178 = vshrl.u32 %v2177, 7
        %v2179 = vsub.s32 %v2176, %v2178
        %v2180 = vrot.slane %v2166, %v2179
        %v2181 = vcombine.low %v2157, %v2173
        %v2182 = vcombine.high %v2157, %v2173
        %v2184 = vunpack.c.l.s4 1934713408
        %v2185 = vunpack.c.0.s8 %v2184
        %v2186 = vlaneseq
        %v2187 = vshrl.u32 %v2186, 7
        %v2188 = vsub.s32 %v2185, %v2187
        %v2189 = vrot.slane %v2181, %v2188
        %v2191 = vunpack.c.l.s4 1934713408
        %v2192 = vunpack.c.0.s8 %v2191
        %v2193 = vlaneseq
        %v2194 = vshrl.u32 %v2193, 7
        %v2195 = vsub.s32 %v2192, %v2194
        %v2196 = vrot.slane %v2182, %v2195
        %v2197 = vcombine.low %v2164, %v2180
        %v2198 = vcombine.high %v2164, %v2180
        %v2200 = vunpack.c.l.s4 1934713408
        %v2201 = vunpack.c.0.s8 %v2200
        %v2202 = vlaneseq
        %v2203 = vshrl.u32 %v2202, 7
        %v2204 = vsub.s32 %v2201, %v2203
        %v2205 = vrot.slane %v2197, %v2204
        %v2207 = vunpack.c.l.s4 1934713408
        %v2208 = vunpack.c.0.s8 %v2207
        %v2209 = vlaneseq
        %v2210 = vshrl.u32 %v2209, 7
        %v2211 = vsub.s32 %v2208, %v2210
        %v2212 = vrot.slane %v2198, %v2211
        %v2213 = vcombine.high %v2189, 0.0
        %v2214 = vcombine.high %v2196, 0.0
        %v2215 = vcombine.high %v2205, 0.0
        %v2216 = vcombine.high %v2212, 0.0
        %v2217 = vcombine.low %v2128, %v2136
        %v2218 = vcombine.high %v2128, %v2136
        %v2220 = vunpack.c.l.s4 1983009808
        %v2221 = vunpack.c.0.s8 %v2220
        %v2222 = vlaneseq
        %v2223 = vshrl.u32 %v2222, 7
        %v2224 = vsub.s32 %v2221, %v2223
        %v2225 = vrot.slane %v2217, %v2224
        %v2227 = vunpack.c.l.s4 1983009808
        %v2228 = vunpack.c.0.s8 %v2227
        %v2229 = vlaneseq
        %v2230 = vshrl.u32 %v2229, 7
        %v2231 = vsub.s32 %v2228, %v2230
        %v2232 = vrot.slane %v2218, %v2231
        %v2233 = vcombine.low %v2132, %v2140
        %v2234 = vcombine.high %v2132, %v2140
        %v2236 = vunpack.c.l.s4 1983009808
        %v2237 = vunpack.c.0.s8 %v2236
        %v2238 = vlaneseq
        %v2239 = vshrl.u32 %v2238, 7
        %v2240 = vsub.s32 %v2237, %v2239
        %v2241 = vrot.slane %v2233, %v2240
        %v2243 = vunpack.c.l.s4 1983009808
        %v2244 = vunpack.c.0.s8 %v2243
        %v2245 = vlaneseq
        %v2246 = vshrl.u32 %v2245, 7
        %v2247 = vsub.s32 %v2244, %v2246
        %v2248 = vrot.slane %v2234, %v2247
        %v2249 = vcombine.low %v2225, %v2241
        %v2250 = vcombine.high %v2225, %v2241
        %v2252 = vunpack.c.l.s4 1934713408
        %v2253 = vunpack.c.0.s8 %v2252
        %v2254 = vlaneseq
        %v2255 = vshrl.u32 %v2254, 7
        %v2256 = vsub.s32 %v2253, %v2255
        %v2257 = vrot.slane %v2249, %v2256
        %v2259 = vunpack.c.l.s4 1934713408
        %v2260 = vunpack.c.0.s8 %v2259
        %v2261 = vlaneseq
        %v2262 = vshrl.u32 %v2261, 7
        %v2263 = vsub.s32 %v2260, %v2262
        %v2264 = vrot.slane %v2250, %v2263
        %v2265 = vcombine.low %v2232, %v2248
        %v2266 = vcombine.high %v2232, %v2248
        %v2268 = vunpack.c.l.s4 1934713408
        %v2269 = vunpack.c.0.s8 %v2268
        %v2270 = vlaneseq
        %v2271 = vshrl.u32 %v2270, 7
        %v2272 = vsub.s32 %v2269, %v2271
        %v2273 = vrot.slane %v2265, %v2272
        %v2275 = vunpack.c.l.s4 1934713408
        %v2276 = vunpack.c.0.s8 %v2275
        %v2277 = vlaneseq
        %v2278 = vshrl.u32 %v2277, 7
        %v2279 = vsub.s32 %v2276, %v2278
        %v2280 = vrot.slane %v2266, %v2279
        %v2281 = vcombine.high %v2257, 0.0
        %v2282 = vcombine.high %v2264, 0.0
        %v2283 = vcombine.high %v2273, 0.0
        %v2284 = vcombine.high %v2280, 0.0
        %2286 = vrot.lane.b32.xlu0 %v2213, 16
        %v2287 = vpop.permute.xlu0 %2286
        %2290 = vrot.lane.b32.xlu0 %v2196, 32
        %v2291 = vpop.permute.xlu0 %2290
        %2294 = vrot.lane.b32.xlu0 %v2214, 48
        %v2295 = vpop.permute.xlu0 %2294
        %2298 = vrot.lane.b32.xlu0 %v2205, 64
        %v2299 = vpop.permute.xlu0 %2298
        %2302 = vrot.lane.b32.xlu0 %v2215, 80
        %v2303 = vpop.permute.xlu0 %2302
        %2306 = vrot.lane.b32.xlu0 %v2212, 96
        %v2307 = vpop.permute.xlu0 %2306
        %2310 = vrot.lane.b32.xlu0 %v2216, 112
        %v2311 = vpop.permute.xlu0 %2310
        %2314 = vrot.lane.b32.xlu0 %v2281, 16
        %v2315 = vpop.permute.xlu0 %2314
        %2318 = vrot.lane.b32.xlu0 %v2264, 32
        %v2319 = vpop.permute.xlu0 %2318
        %2322 = vrot.lane.b32.xlu0 %v2282, 48
        %v2323 = vpop.permute.xlu0 %2322
        %2326 = vrot.lane.b32.xlu0 %v2273, 64
        %v2327 = vpop.permute.xlu0 %2326
        %2330 = vrot.lane.b32.xlu0 %v2283, 80
        %v2331 = vpop.permute.xlu0 %2330
        %2334 = vrot.lane.b32.xlu0 %v2280, 96
        %v2335 = vpop.permute.xlu0 %2334
        %2338 = vrot.lane.b32.xlu0 %v2284, 112
        %v2339 = vpop.permute.xlu0 %2338
        %v2341 = vsel %vm386, %v2189, %v2287
        %v2342 = vsel %vm388, %v2341, %v2291
        %v2343 = vsel %vm390, %v2342, %v2295
        %v2344 = vsel %vm392, %v2343, %v2299
        %v2345 = vsel %vm394, %v2344, %v2303
        %v2346 = vsel %vm396, %v2345, %v2307
        %v2347 = vsel %vm398, %v2346, %v2311
        %v2348 = vsel %vm386, %v2257, %v2315
        %v2349 = vsel %vm388, %v2348, %v2319
        %v2350 = vsel %vm390, %v2349, %v2323
        %v2351 = vsel %vm392, %v2350, %v2327
        %v2352 = vsel %vm394, %v2351, %v2331
        %v2353 = vsel %vm396, %v2352, %v2335
        %v2354 = vsel %vm398, %v2353, %v2339
        %2355 = vst [vmem:[#allocation2 + $0x40] sm:$0xf] %v2347
        %2356 = vst [vmem:[#allocation2 + $0x48] sm:$0xf] %v2354
        %v2357 = vld [vmem:[%s1] sm:$0xff]
        %v2358 = vld [vmem:[#allocation2] sm:$0xff]
        %v2359 = vld [vmem:[#allocation2 + $0x8] sm:$0xff]
        %v2360 = vld [vmem:[#allocation2 + $0x10] sm:$0xff]
        %v2361 = vld [vmem:[#allocation2 + $0x18] sm:$0xff]
        %v2362 = vld [vmem:[#allocation2 + $0x20] sm:$0xff]
        %v2363 = vld [vmem:[#allocation2 + $0x28] sm:$0xff]
        %v2364 = vld [vmem:[#allocation2 + $0x30] sm:$0xff]
        %v2365 = vld [vmem:[#allocation2 + $0x38] sm:$0xff]
        %v2366 = vld [vmem:[#allocation2 + $0x40] sm:$0xf]
        %v2367 = vld [vmem:[#allocation2 + $0x48] sm:$0xf]
        %v2368 = vld [vmem:[%s2] sm:$0xff]
        %2370 = vset.pattern.permute.xlu0 0
        %2371 = vperm.xlu0 %2370, %v2368
        %v2372 = vpop.permute.xlu0 %2371
        %vm2374 = vcmask 293888
        %v2376 = vsel %vm2374, %v2357, 0
        %vm2378 = vcmask 1043456
        %v2380 = vsel %vm2378, %v2366, 0
        %v2383 = vsel %vm2378, %v2367, 0
        %2385 = vmatprep.subr.mxu0 0.0
        %2386 = vmatpush1.msra.mxu0 0.0
        %2387 = vmatprep.subr.mxu0 0.0
        %2388 = vmatpush1.msra.mxu0 0.0
        %2389 = vmatprep.subr.mxu0 0.0
        %2390 = vmatpush1.msra.mxu0 0.0
        %2391 = vmatprep.subr.mxu0 0.0
        %2392 = vmatpush1.msra.mxu0 0.0
        %2393 = vmatprep.subr.mxu0 0.0
        %2394 = vmatpush1.msra.mxu0 0.0
        %2395 = vmatprep.subr.mxu0 0.0
        %2396 = vmatpush1.msra.mxu0 0.0
        %2397 = vmatprep.subr.mxu0 0.0
        %2398 = vmatpush1.msra.mxu0 0.0
        %2399 = vmatprep.subr.mxu0 0.0
        %2400 = vmatpush1.msra.mxu0 0.0
        %2401 = vmatprep.subr.mxu0 0.0
        %2402 = vmatpush1.msra.mxu0 0.0
        %2403 = vmatprep.subr.mxu0 0.0
        %2404 = vmatpush1.msra.mxu0 0.0
        %2405 = vmatprep.subr.mxu0 0.0
        %2406 = vmatpush1.msra.mxu0 0.0
        %2407 = vmatprep.subr.mxu0 %v2383
        %2408 = vmatpush1.msra.mxu0 %v2380
        %2409 = vmatprep.subr.mxu0 %v2365
        %2410 = vmatpush1.msra.mxu0 %v2364
        %2411 = vmatprep.subr.mxu0 %v2363
        %2412 = vmatpush1.msra.mxu0 %v2362
        %2413 = vmatprep.subr.mxu0 %v2361
        %2414 = vmatpush1.msra.mxu0 %v2360
        %2415 = vmatprep.subr.mxu0 %v2359
        %2416 = vmatpush1.msra.mxu0 %v2358
        %2417 = vmatprep.subr.mxu0 0.0
        %2418 = vmatpush2.msra.mxu0 0.0
        %2419 = vmatprep.subr.mxu0 0.0
        %2420 = vmatpush2.msra.mxu0 0.0
        %2421 = vmatprep.subr.mxu0 0.0
        %2422 = vmatpush2.msra.mxu0 0.0
        %2423 = vmatprep.subr.mxu0 0.0
        %2424 = vmatpush2.msra.mxu0 0.0
        %2425 = vmatprep.subr.mxu0 0.0
        %2426 = vmatpush2.msra.mxu0 0.0
        %2427 = vmatprep.subr.mxu0 0.0
        %2428 = vmatpush2.msra.mxu0 0.0
        %2429 = vmatprep.subr.mxu0 0.0
        %2430 = vmatpush2.msra.mxu0 0.0
        %2431 = vmatprep.subr.mxu0 0.0
        %2432 = vmatpush2.msra.mxu0 0.0
        %2433 = vmatprep.subr.mxu0 0.0
        %2434 = vmatpush2.msra.mxu0 0.0
        %2435 = vmatprep.subr.mxu0 0.0
        %2436 = vmatpush2.msra.mxu0 0.0
        %2437 = vmatprep.subr.mxu0 0.0
        %2438 = vmatpush2.msra.mxu0 0.0
        %2439 = vmatprep.subr.mxu0 0.0
        %2440 = vmatpush2.msra.mxu0 0.0
        %2441 = vmatprep.subr.mxu0 0.0
        %2442 = vmatpush2.msra.mxu0 0.0
        %2443 = vmatprep.subr.mxu0 0.0
        %2444 = vmatpush2.msra.mxu0 0.0
        %2445 = vmatprep.subr.mxu0 0.0
        %2446 = vmatpush2.msra.mxu0 0.0
        %2447 = vmatprep.subr.mxu0 0.0
        %2448 = vmatpush2.msra.mxu0 0.0
        %2449 = vmatprep.mubr.f32.mxu0 0.0
        %2450 = vmatmul.mubr.f32.gmra.mxu0 %v2376
        %v2451 = vpop.f32.mrf.mxu0
        %v2452 = vadd.f32 %v2372, %v2451
        %v2453 = vpop.f32.mrf.mxu0
        %v2454 = vadd.f32 %v2372, %v2453
        %2455 = vdwg.mxu0
        %2456 = vst [vmem:[%s177] sm:$0xff] %v2452
        %2457 = vst [vmem:[%s177 + $0x8] sm:$0xff] %v2454
        %s2458 = sand.u32 %s107, 1
        %s2459 = scalar_lea.sflag [#allocation4], %s2458
        %s2460 = sand.u32 %s107, 1
        %s2461 = smul.addr %s2460, 16
        %s2462 = scalar_lea.vmem [#allocation3], %s2461
        // Predicated region
        $region33: #{tpu_custom_call.1} parent=31 // pred_check
          %p2463 = pneg %p117
        $region34: #{tpu_custom_call.1} parent=31 // pred_check_branch
          %2465 = sbr.rel (%p2463) target = $region36
        $region35: #{tpu_custom_call.1} parent=31 // pred_region
          %s2466 = smul.u32 2, %s22
          %s2468 = ssub.s32 256, 256
          %2469 = vsyncadd %s2459, %s2468
          %s2470 = smul.addr %s21, 2
          %s2471 = sadd.s32 %s2466, %s2470
          %s2472 = smul.addr %s2471, 128
          %s2473 = scalar_lea.hbm %s3, %s2472
          %s2475 = sshll.u32 %s2462, 4
          %s2476 = int_to_ptr.vmem [resolvable:$true] %s2475
          %2478 = dma.vmem_to_hbm [thread:$0]  %s2476, 256, %s2473, %s2459
        $region36: #{tpu_custom_call.1} parent=31 // pred_fallthru
          _
      $region32: #{tpu_custom_call.1} parent=5 // pred_fallthru
        _
      %p2479 = scmp.le.s32.totalorder 2, %s12
      // Predicated region
      $region37: #{tpu_custom_call.1} parent=5 // pred_check
        %p2480 = pneg %p2479
      $region38: #{tpu_custom_call.1} parent=5 // pred_check_branch
        %2482 = sbr.rel (%p2480) target = $region40
      $region39: #{tpu_custom_call.1} parent=5 // pred_region
        %s2483 = ssub.s32 %s12, 2
        // Predicated region
        $region41: #{tpu_custom_call.1} parent=39 // pred_check
          %p2484 = pneg %p123
        $region42: #{tpu_custom_call.1} parent=39 // pred_check_branch
          %2486 = sbr.rel (%p2484) target = $region44
        $region43: #{tpu_custom_call.1} parent=39 // pred_region
          %s2487 = sand.u32 %s108, 1
          %s2488 = scalar_lea.sflag [#allocation4], %s2487
          %s2489 = sand.u32 %s108, 1
          %s2490 = smul.addr %s2489, 16
          %s2491 = scalar_lea.vmem [#allocation3], %s2490
          %2492 = dma.done %s2488, 256
        $region44: #{tpu_custom_call.1} parent=39 // pred_fallthru
          _
      $region40: #{tpu_custom_call.1} parent=5 // pred_fallthru
        _
    $region6: #{tpu_custom_call.1} parent=1 // loop_footer
      %s16 = sadd.s32 1, %s12
    $region7: #{tpu_custom_call.1} parent=1 // loop_footer_branch
      %11 = sbr.rel target = $region3
    $region8: #{tpu_custom_call.1} parent=1 // loop_exit
      _
    %2493 = vsyncpa [#allocation4], 1
    %s2494 = scalar_lea.sflag [#allocation4], 1
    %2495 = vsyncpa %s2494, 1

</llo_original>
